<compile_context>
chip_gen: v5e
topology: v5e:2x2
jax: 0.10.0
libtpu: 0.0.40
codegen_flags: <defaults>
</compile_context>

<pallas_src>
import functools
import math

import jax
import jax.numpy as jnp
from jax.experimental import pallas as pl
from jax.experimental.pallas import tpu as pltpu


# ----------------------------------------------------------------------------
# shared math helpers (used by both the kernel and the pure-JAX reference)
# ----------------------------------------------------------------------------
def _layernorm(x, gamma, beta, eps=1e-5):
    mu = jnp.mean(x, axis=-1, keepdims=True)
    xc = x - mu
    var = jnp.mean(xc * xc, axis=-1, keepdims=True)
    return xc * jax.lax.rsqrt(var + eps) * gamma + beta


_GELU_C = math.sqrt(2.0 / math.pi)


def _gelu_fast(x):
    # 0.5*x*(1+tanh(u)) == x*sigmoid(2u): identical math, fewer VPU ops,
    # the transcendental stays on the (otherwise idle) EUP slot.
    u = x + 0.044715 * (x * x * x)
    return x * jax.nn.sigmoid((2.0 * _GELU_C) * u)


def _prep_params(params, num_heads):
    """Pre-transpose / fuse / cast the module weights for the kernel."""
    C = params["norm1_weight"].shape[0]
    head_dim = C // num_heads
    scale = head_dim ** (-0.5)
    bf16, f32 = jnp.bfloat16, jnp.float32
    # torch Linear weights are (out, in); the kernel wants (in, out).
    # The module's "(q @ k^T) / scale" (DIVIDE) is folded into the q columns.
    wqkv = jnp.concatenate(
        [params["wq"].T / scale, params["wk"].T, params["wv"].T], axis=1
    ).astype(bf16)                                                    # (C, 3C)
    wp = params["proj_w"].T.astype(bf16)
    w1 = params["fc1_w"].T.astype(bf16)
    w2 = params["fc2_w"].T.astype(bf16)
    vecs = jnp.stack([params["norm1_weight"], params["norm1_bias"],
                      params["proj_b"], params["norm2_weight"],
                      params["norm2_bias"], params["fc2_b"]]).astype(f32)
    b1 = params["fc1_b"].reshape(1, -1).astype(f32)
    return {"wqkv": wqkv, "wp": wp, "w1": w1, "w2": w2, "vecs": vecs, "b1": b1}


# ----------------------------------------------------------------------------
# generation-aware heuristics (v5e / v6e / v7x)
# ----------------------------------------------------------------------------
_MIB = 1024 * 1024


def _hw_config():
    kind = ""
    try:
        kind = jax.devices()[0].device_kind.lower()
    except Exception:
        kind = ""
    vmem_physical = 0
    try:
        info = pltpu.get_tpu_info()
        vmem_physical = int(getattr(info, "vmem_capacity_bytes", 0) or 0)
    except Exception:
        vmem_physical = 0
    if not vmem_physical:
        vmem_physical = (64 if "v7" in kind else 128) * _MIB
    new_gen = ("v6" in kind) or ("v7" in kind)            # bf16 VPU/EUP
    two_tc = any(t in kind for t in ("v7", "v4", "v5p"))  # 2 TensorCores/chip
    return {
        # leave ~20% headroom for Mosaic scratch / semaphores / spill
        "vmem_cap": max(32 * _MIB, int(0.80 * vmem_physical)),
        "mlp_bf16": new_gen,
        "min_grid_steps": 2 if two_tc else 1,
        "row_granule": 256 if new_gen else 128,
        "max_rows": 512 if vmem_physical <= 64 * _MIB else 2048,
    }


def _rows_budget(vmem_cap, C, CH, weight_bytes):
    """Rough rows-per-step ceiling so the tile estimate stays inside VMEM."""
    per_row = 16 * C + 30 * C + 6 * CH          # io tiles (2x2 f32) + intermediates
    usable = vmem_cap - weight_bytes - 6 * _MIB
    return max(8, usable // max(per_row, 1))


def _choose_block_b(B, N, *, max_rows, min_steps, row_granule):
    """Batch elements per grid step: big, granule-friendly tiles, but always
    enough grid steps to feed every TensorCore."""
    cands = [d for d in range(1, B + 1) if B % d == 0]
    max_rows = max(max_rows, N)

    def score(d):
        rows, steps = d * N, B // d
        fits = rows <= max_rows
        enough = (steps >= min_steps) or (B < min_steps)
        even = (steps % min_steps) == 0
        padded = steps * pl.cdiv(rows, row_granule) * row_granule
        return (fits, enough, even, -padded, rows)

    return max(cands, key=score)


def _vmem_limit_bytes(rows, C, CH, weight_copies, cap):
    io = 2 * 2 * rows * C * 4                                    # x/out, 2-buffered
    weights = 2 * (3 * C * C + C * C + 2 * C * CH)               # bf16
    smalls = 4 * (6 * C + CH) + 4096
    interm = rows * (30 * C + 6 * CH)
    est = int(1.3 * (io + weight_copies * weights + smalls + interm))
    return int(min(cap, max(est, 32 * _MIB)))


# ----------------------------------------------------------------------------
# kernel
# ----------------------------------------------------------------------------
def _expand_cls_block_kernel(x_ref, wqkv_ref, wp_ref, w1_ref, w2_ref,
                             vec_ref, b1_ref, o_ref, *,
                             num_heads, head_dim, block_b, seq, dim, hidden,
                             mlp_bf16):
    TB, N, C, CH, H = block_b, seq, dim, hidden, num_heads
    R = TB * N
    f32, bf16 = jnp.float32, jnp.bfloat16

    x = x_ref[...].astype(f32)                                       # (TB,N,C)

    g1 = vec_ref[0:1, :].reshape(1, 1, C)
    be1 = vec_ref[1:2, :].reshape(1, 1, C)
    bp = vec_ref[2:3, :]                                             # (1,C)
    g2 = vec_ref[3:4, :].reshape(1, 1, C)
    be2 = vec_ref[4:5, :].reshape(1, 1, C)
    b2 = vec_ref[5:6, :]                                             # (1,C)
    b1 = b1_ref[...]                                                 # (1,CH)

    # ---- norm1 (f32) -------------------------------------------------------
    h = _layernorm(x, g1, be1)

    # ---- fused qkv: one row-dense (R,C)@(C,3C) bf16 MXU matmul -------------
    h_flat = h.astype(bf16).reshape(R, C)
    qkv = jnp.dot(h_flat, wqkv_ref[...], preferred_element_type=f32)  # (R,3C)
    qkv = qkv.reshape(TB, N, 3 * C)
    q = qkv[:, 0:1, 0:C].reshape(TB, C)          # only the CLS token's q is used
    k = qkv[:, :, C:2 * C]                       # (TB,N,C)
    v = qkv[:, :, 2 * C:3 * C]                   # (TB,N,C)

    # head-membership masks, built in-kernel (no extra DMA inputs)
    hh = jax.lax.broadcasted_iota(jnp.int32, (H, C), 0)
    cc = jax.lax.broadcasted_iota(jnp.int32, (H, C), 1)
    lo = hh * head_dim
    mask_hc = ((cc >= lo) & (cc < lo + head_dim)).astype(bf16)        # (H,C)
    cc2 = jax.lax.broadcasted_iota(jnp.int32, (C, H), 0)
    hh2 = jax.lax.broadcasted_iota(jnp.int32, (C, H), 1)
    lo2 = hh2 * head_dim
    mask_ch = ((cc2 >= lo2) & (cc2 < lo2 + head_dim)).astype(bf16)    # (C,H)

    # ---- per-head scores: VPU broadcast multiply + row-dense bf16 matmul ---
    qk = (q[:, None, :] * k).astype(bf16).reshape(R, C)
    s = jnp.dot(qk, mask_ch, preferred_element_type=f32).reshape(TB, N, H)

    # ---- softmax over the key axis (f32); divide -> EUP approx reciprocal --
    m = jnp.max(s, axis=1, keepdims=True)
    e = jnp.exp(s - m)
    a = e * pl.reciprocal(jnp.sum(e, axis=1, keepdims=True), approx=True)

    # ---- attn @ v: expand head probs over channels (bf16 MXU), weight, reduce
    a_exp = jnp.dot(a.astype(bf16).reshape(R, H), mask_hc,
                    preferred_element_type=f32).reshape(TB, N, C)
    o = jnp.sum(a_exp * v, axis=1)                                    # (TB,C)

    attn_out = jnp.dot(o.astype(bf16), wp_ref[...],
                       preferred_element_type=f32) + bp               # (TB,C)

    # residual 1: CLS-attention output .expand(-1, N, -1) + x (fused)
    x1 = x + attn_out[:, None, :]                                     # (TB,N,C)

    # ---- norm2 + Mlp --------------------------------------------------------
    h2 = _layernorm(x1, g2, be2).astype(bf16).reshape(R, C)
    z1 = jnp.dot(h2, w1_ref[...], preferred_element_type=f32) + b1    # (R,CH)
    if mlp_bf16:
        z1 = _gelu_fast(z1.astype(bf16))          # packed bf16 on v6e/v7x
    else:
        z1 = _gelu_fast(z1).astype(bf16)          # f32 GELU on v5e (no bf16 VPU)
    z2 = jnp.dot(z1, w2_ref[...], preferred_element_type=f32) + b2    # (R,C)

    o_ref[...] = (x1 + z2.reshape(TB, N, C)).astype(o_ref.dtype)


# ----------------------------------------------------------------------------
# wrapper
# ----------------------------------------------------------------------------
def expand_cls_block(x, params, num_heads=8, *, block_b=None, mlp_bf16=None):
    """Pallas TPU forward of ExpandCLSBlock (dropout / DropPath are identity)."""
    B, N, C = x.shape
    if C % num_heads:
        raise ValueError("dim must be divisible by num_heads")
    head_dim = C // num_heads
    cfg = _hw_config()
    if mlp_bf16 is None:
        mlp_bf16 = cfg["mlp_bf16"]
    prep = _prep_params(params, num_heads)
    CH = prep["w1"].shape[1]
    weight_bytes = 2 * (3 * C * C + C * C + 2 * C * CH)

    if block_b is None:
        max_rows = min(cfg["max_rows"],
                       _rows_budget(cfg["vmem_cap"], C, CH, weight_bytes))
        TB = _choose_block_b(B, N, max_rows=max_rows,
                             min_steps=cfg["min_grid_steps"],
                             row_granule=cfg["row_granule"])
    else:
        TB = block_b
    if B % TB:
        raise ValueError(f"block_b={TB} must divide batch={B}")

    kernel = functools.partial(
        _expand_cls_block_kernel, num_heads=num_heads, head_dim=head_dim,
        block_b=TB, seq=N, dim=C, hidden=CH, mlp_bf16=bool(mlp_bf16))

    def call(single_buffer_weights):
        def const_spec(shape):
            idx = lambda b: (0,) * len(shape)
            if single_buffer_weights:
                # constant-index weights revisited every step: single-buffer them
                return pl.BlockSpec(shape, idx, pipeline_mode=pl.Buffered(1))
            return pl.BlockSpec(shape, idx)

        weight_copies = 1 if single_buffer_weights else 2
        return pl.pallas_call(
            kernel,
            out_shape=jax.ShapeDtypeStruct((B, N, C), x.dtype),
            grid_spec=pltpu.PrefetchScalarGridSpec(
                num_scalar_prefetch=0,
                grid=(B // TB,),
                in_specs=[
                    pl.BlockSpec((TB, N, C), lambda b: (b, 0, 0)),  # x
                    const_spec((C, 3 * C)),     # [Wq^T/scale | Wk^T | Wv^T]  bf16
                    const_spec((C, C)),         # Wproj^T                      bf16
                    const_spec((C, CH)),        # Wfc1^T                       bf16
                    const_spec((CH, C)),        # Wfc2^T                       bf16
                    const_spec((6, C)),         # LN g/b (x2), proj bias, fc2 bias
                    const_spec((1, CH)),        # fc1 bias
                ],
                out_specs=pl.BlockSpec((TB, N, C), lambda b: (b, 0, 0)),
            ),
            compiler_params=pltpu.CompilerParams(
                dimension_semantics=("parallel",),
                vmem_limit_bytes=_vmem_limit_bytes(
                    TB * N, C, CH, weight_copies, cfg["vmem_cap"])),
        )(x, prep["wqkv"], prep["wp"], prep["w1"], prep["w2"],
          prep["vecs"], prep["b1"])

    try:
        return call(single_buffer_weights=True)
    except Exception as e:
        # Only fall back when the failure is about single-buffering itself;
        # genuine lowering / shape / resource errors are re-raised.
        msg = f"{type(e).__name__}: {e}".lower()
        if any(t in msg for t in ("buffered", "buffer_count", "pipeline_mode",
                                  "pipeline mode")):
            return call(single_buffer_weights=False)
        raise


# ----------------------------------------------------------------------------
# pure-JAX reference (mirrors the PyTorch forward; same bf16 cast points as the
# kernel — the only deliberately-unmatched ops are the EUP approx reciprocal in
# the softmax and native-bf16 GELU rounding details)
# ----------------------------------------------------------------------------
def reference(x, params, num_heads, *, mlp_bf16):
    B, N, C = x.shape
    hd = C // num_heads
    prep = _prep_params(params, num_heads)
    bf16, f32 = jnp.bfloat16, jnp.float32

    h = _layernorm(x, params["norm1_weight"], params["norm1_bias"])
    qkv = jnp.einsum("bnc,cd->bnd", h.astype(bf16), prep["wqkv"],
                     preferred_element_type=f32)                     # (B,N,3C)
    q = qkv[:, 0, 0:C]                                               # (B,C)
    k = qkv[:, :, C:2 * C]
    v = qkv[:, :, 2 * C:3 * C]

    qk = (q[:, None, :] * k).astype(bf16).astype(f32)                # (B,N,C)
    s = qk.reshape(B, N, num_heads, hd).sum(-1)                      # (B,N,H)
    m = s.max(axis=1, keepdims=True)
    e = jnp.exp(s - m)
    a = e / e.sum(axis=1, keepdims=True)                             # (B,N,H)
    a_exp = jnp.repeat(a.astype(bf16).astype(f32), hd, axis=-1)      # (B,N,C)
    o = (a_exp * v).sum(axis=1)                                      # (B,C)
    attn = jnp.einsum("bc,cd->bd", o.astype(bf16), prep["wp"],
                      preferred_element_type=f32) + params["proj_b"]
    x1 = x + attn[:, None, :]                        # .expand(-1,N,-1) + residual

    h2 = _layernorm(x1, params["norm2_weight"], params["norm2_bias"])
    z1 = jnp.einsum("bnc,ch->bnh", h2.astype(bf16), prep["w1"],
                    preferred_element_type=f32) + params["fc1_b"]
    if mlp_bf16:
        z1 = _gelu_fast(z1.astype(bf16))
    else:
        z1 = _gelu_fast(z1).astype(bf16)
    z2 = jnp.einsum("bnh,hc->bnc", z1, prep["w2"],
                    preferred_element_type=f32) + params["fc2_b"]
    return x1 + z2


if __name__ == "__main__":
    B, N, C, H = 4, 16, 128, 8          # C kept a multiple of 128 (lane-dense)
    CH = int(4.0 * C)                    # mlp_ratio = 4.0

    key = jax.random.PRNGKey(0)
    ks = jax.random.split(key, 14)
    f32 = jnp.float32

    def w(k, shape, std):
        return std * jax.random.normal(k, shape, f32)

    params = {
        "norm1_weight": 1.0 + 0.02 * jax.random.normal(ks[1], (C,), f32),
        "norm1_bias":   0.02 * jax.random.normal(ks[2], (C,), f32),
        "wq":     w(ks[3], (C, C), C ** -0.5),      # torch Linear layout (out, in)
        "wk":     w(ks[4], (C, C), C ** -0.5),
        "wv":     w(ks[5], (C, C), C ** -0.5),
        "proj_w": w(ks[6], (C, C), C ** -0.5),
        "proj_b": 0.02 * jax.random.normal(ks[7], (C,), f32),
        "norm2_weight": 1.0 + 0.02 * jax.random.normal(ks[8], (C,), f32),
        "norm2_bias":   0.02 * jax.random.normal(ks[9], (C,), f32),
        "fc1_w": w(ks[10], (CH, C), C ** -0.5),
        "fc1_b": 0.02 * jax.random.normal(ks[11], (CH,), f32),
        "fc2_w": w(ks[12], (C, CH), CH ** -0.5),
        "fc2_b": 0.02 * jax.random.normal(ks[13], (C,), f32),
    }
    x = jax.random.normal(ks[0], (B, N, C), f32)

    cfg = _hw_config()
    mlp_bf16 = cfg["mlp_bf16"]

    y = expand_cls_block(x, params, num_heads=H, mlp_bf16=mlp_bf16)
    y = jax.block_until_ready(y)

    y_ref = reference(x, params, num_heads=H, mlp_bf16=mlp_bf16)
    assert y.shape == (B, N, C)
    err = float(jnp.max(jnp.abs(y - y_ref)))
    # bf16-matmul pipeline; kernel-only approx reciprocal + native bf16 GELU
    # rounding are the residual sources of mismatch.
    assert jnp.allclose(y, y_ref, atol=2e-2, rtol=2e-2), f"max abs err {err}"

    print("KERNEL_OK")
</pallas_src>

<mosaic_0001>
module attributes {stable_mosaic.version = 11 : i64} {
  func.func @_expand_cls_block_kernel(%arg0: i32, %arg1: memref<4x16x128xf32, #tpu.memory_space<vmem>>, %arg2: memref<128x384xbf16, #tpu.memory_space<vmem>>, %arg3: memref<128x128xbf16, #tpu.memory_space<vmem>>, %arg4: memref<128x512xbf16, #tpu.memory_space<vmem>>, %arg5: memref<512x128xbf16, #tpu.memory_space<vmem>>, %arg6: memref<6x128xf32, #tpu.memory_space<vmem>>, %arg7: memref<1x512xf32, #tpu.memory_space<vmem>>, %arg8: memref<4x16x128xf32, #tpu.memory_space<vmem>>) attributes {dimension_semantics = [#tpu.dimension_semantics<parallel>], iteration_bounds = array<i64: 1>, scalar_prefetch = 0 : i64, scratch_operands = 0 : i64, tpu.core_type = #tpu.core_type<tc>, window_params = [{transform_indices = @transform_0, window_bounds = array<i64: 4, 16, 128>}, {pipeline_mode = #tpu.pipeline_mode<synchronous>, transform_indices = @transform_1, window_bounds = array<i64: 128, 384>}, {pipeline_mode = #tpu.pipeline_mode<synchronous>, transform_indices = @transform_2, window_bounds = array<i64: 128, 128>}, {pipeline_mode = #tpu.pipeline_mode<synchronous>, transform_indices = @transform_3, window_bounds = array<i64: 128, 512>}, {pipeline_mode = #tpu.pipeline_mode<synchronous>, transform_indices = @transform_4, window_bounds = array<i64: 512, 128>}, {pipeline_mode = #tpu.pipeline_mode<synchronous>, transform_indices = @transform_5, window_bounds = array<i64: 6, 128>}, {pipeline_mode = #tpu.pipeline_mode<synchronous>, transform_indices = @transform_6, window_bounds = array<i64: 1, 512>}, {transform_indices = @transform_7, window_bounds = array<i64: 4, 16, 128>}]} {
    %c0 = arith.constant 0 : index
    %c0_0 = arith.constant 0 : index
    %c0_1 = arith.constant 0 : index
    %0 = vector.load %arg1[%c0, %c0_0, %c0_1] : memref<4x16x128xf32, #tpu.memory_space<vmem>>, vector<4x16x128xf32>
    %c0_2 = arith.constant 0 : index
    %c0_3 = arith.constant 0 : index
    %1 = vector.load %arg6[%c0_2, %c0_3] : memref<6x128xf32, #tpu.memory_space<vmem>>, vector<1x128xf32>
    %2 = vector.shape_cast %1 : vector<1x128xf32> to vector<1x1x128xf32>
    %c1 = arith.constant 1 : index
    %c0_4 = arith.constant 0 : index
    %3 = vector.load %arg6[%c1, %c0_4] : memref<6x128xf32, #tpu.memory_space<vmem>>, vector<1x128xf32>
    %4 = vector.shape_cast %3 : vector<1x128xf32> to vector<1x1x128xf32>
    %c2 = arith.constant 2 : index
    %c0_5 = arith.constant 0 : index
    %5 = vector.load %arg6[%c2, %c0_5] : memref<6x128xf32, #tpu.memory_space<vmem>>, vector<1x128xf32>
    %c3 = arith.constant 3 : index
    %c0_6 = arith.constant 0 : index
    %6 = vector.load %arg6[%c3, %c0_6] : memref<6x128xf32, #tpu.memory_space<vmem>>, vector<1x128xf32>
    %7 = vector.shape_cast %6 : vector<1x128xf32> to vector<1x1x128xf32>
    %c4 = arith.constant 4 : index
    %c0_7 = arith.constant 0 : index
    %8 = vector.load %arg6[%c4, %c0_7] : memref<6x128xf32, #tpu.memory_space<vmem>>, vector<1x128xf32>
    %9 = vector.shape_cast %8 : vector<1x128xf32> to vector<1x1x128xf32>
    %c5 = arith.constant 5 : index
    %c0_8 = arith.constant 0 : index
    %10 = vector.load %arg6[%c5, %c0_8] : memref<6x128xf32, #tpu.memory_space<vmem>>, vector<1x128xf32>
    %c0_9 = arith.constant 0 : index
    %c0_10 = arith.constant 0 : index
    %11 = vector.load %arg7[%c0_9, %c0_10] : memref<1x512xf32, #tpu.memory_space<vmem>>, vector<1x512xf32>
    %cst = arith.constant dense<0.000000e+00> : vector<4x16xf32>
    %12 = vector.multi_reduction <add>, %0, %cst [2] : vector<4x16x128xf32> to vector<4x16xf32>
    %13 = vector.shape_cast %12 : vector<4x16xf32> to vector<4x16x1xf32>
    %cst_11 = arith.constant 1.280000e+02 : f32
    %14 = vector.broadcast %cst_11 : f32 to vector<4x16x1xf32>
    %15 = arith.divf %13, %14 : vector<4x16x1xf32>
    %16 = vector.broadcast %15 : vector<4x16x1xf32> to vector<4x16x128xf32>
    %17 = arith.subf %0, %16 : vector<4x16x128xf32>
    %18 = arith.mulf %17, %17 : vector<4x16x128xf32>
    %cst_12 = arith.constant dense<0.000000e+00> : vector<4x16xf32>
    %19 = vector.multi_reduction <add>, %18, %cst_12 [2] : vector<4x16x128xf32> to vector<4x16xf32>
    %20 = vector.shape_cast %19 : vector<4x16xf32> to vector<4x16x1xf32>
    %cst_13 = arith.constant 1.280000e+02 : f32
    %21 = vector.broadcast %cst_13 : f32 to vector<4x16x1xf32>
    %22 = arith.divf %20, %21 : vector<4x16x1xf32>
    %cst_14 = arith.constant 9.99999974E-6 : f32
    %23 = vector.broadcast %cst_14 : f32 to vector<4x16x1xf32>
    %24 = arith.addf %22, %23 : vector<4x16x1xf32>
    %25 = math.rsqrt %24 : vector<4x16x1xf32>
    %26 = vector.broadcast %25 : vector<4x16x1xf32> to vector<4x16x128xf32>
    %27 = arith.mulf %17, %26 : vector<4x16x128xf32>
    %28 = vector.broadcast %2 : vector<1x1x128xf32> to vector<4x16x128xf32>
    %29 = arith.mulf %27, %28 : vector<4x16x128xf32>
    %30 = vector.broadcast %4 : vector<1x1x128xf32> to vector<4x16x128xf32>
    %31 = arith.addf %29, %30 : vector<4x16x128xf32>
    %32 = arith.truncf %31 : vector<4x16x128xf32> to vector<4x16x128xbf16>
    %33 = vector.shape_cast %32 : vector<4x16x128xbf16> to vector<64x128xbf16>
    %c0_15 = arith.constant 0 : index
    %c0_16 = arith.constant 0 : index
    %34 = vector.load %arg2[%c0_15, %c0_16] : memref<128x384xbf16, #tpu.memory_space<vmem>>, vector<128x384xbf16>
    %cst_17 = arith.constant dense<0.000000e+00> : vector<64x384xf32>
    %35 = tpu.matmul %33, %34, %cst_17 {dimension_numbers = #tpu.dot_dimension_numbers<[1], [0], [0], [1], [0, 0, 1, 1], [], []>} : vector<64x128xbf16>, vector<128x384xbf16>, vector<64x384xf32> -> vector<64x384xf32>
    %36 = vector.shape_cast %35 : vector<64x384xf32> to vector<4x16x384xf32>
    %37 = vector.extract_strided_slice %36 {offsets = [0, 0, 0], sizes = [4, 1, 128], strides = [1, 1, 1]} : vector<4x16x384xf32> to vector<4x1x128xf32>
    %38 = vector.shape_cast %37 : vector<4x1x128xf32> to vector<4x128xf32>
    %39 = vector.extract_strided_slice %36 {offsets = [0, 0, 128], sizes = [4, 16, 128], strides = [1, 1, 1]} : vector<4x16x384xf32> to vector<4x16x128xf32>
    %40 = vector.extract_strided_slice %36 {offsets = [0, 0, 256], sizes = [4, 16, 128], strides = [1, 1, 1]} : vector<4x16x384xf32> to vector<4x16x128xf32>
    %41 = tpu.iota {dimensions = array<i32: 0>} : vector<8x128xi32>
    %42 = tpu.iota {dimensions = array<i32: 1>} : vector<8x128xi32>
    %c16_i32 = arith.constant 16 : i32
    %43 = vector.broadcast %c16_i32 : i32 to vector<8x128xi32>
    %44 = arith.muli %41, %43 : vector<8x128xi32>
    %45 = arith.cmpi sge, %42, %44 : vector<8x128xi32>
    %c16_i32_18 = arith.constant 16 : i32
    %46 = vector.broadcast %c16_i32_18 : i32 to vector<8x128xi32>
    %47 = arith.addi %44, %46 : vector<8x128xi32>
    %48 = arith.cmpi slt, %42, %47 : vector<8x128xi32>
    %49 = arith.andi %45, %48 : vector<8x128xi1>
    %50 = arith.extui %49 : vector<8x128xi1> to vector<8x128xi32>
    %51 = arith.sitofp %50 : vector<8x128xi32> to vector<8x128xf32>
    %52 = arith.truncf %51 : vector<8x128xf32> to vector<8x128xbf16>
    %53 = tpu.iota {dimensions = array<i32: 0>} : vector<128x8xi32>
    %54 = tpu.iota {dimensions = array<i32: 1>} : vector<128x8xi32>
    %c16_i32_19 = arith.constant 16 : i32
    %55 = vector.broadcast %c16_i32_19 : i32 to vector<128x8xi32>
    %56 = arith.muli %54, %55 : vector<128x8xi32>
    %57 = arith.cmpi sge, %53, %56 : vector<128x8xi32>
    %c16_i32_20 = arith.constant 16 : i32
    %58 = vector.broadcast %c16_i32_20 : i32 to vector<128x8xi32>
    %59 = arith.addi %56, %58 : vector<128x8xi32>
    %60 = arith.cmpi slt, %53, %59 : vector<128x8xi32>
    %61 = arith.andi %57, %60 : vector<128x8xi1>
    %62 = arith.extui %61 : vector<128x8xi1> to vector<128x8xi32>
    %63 = arith.sitofp %62 : vector<128x8xi32> to vector<128x8xf32>
    %64 = arith.truncf %63 : vector<128x8xf32> to vector<128x8xbf16>
    %65 = vector.shape_cast %38 : vector<4x128xf32> to vector<4x1x128xf32>
    %66 = vector.broadcast %65 : vector<4x1x128xf32> to vector<4x16x128xf32>
    %67 = arith.mulf %66, %39 : vector<4x16x128xf32>
    %68 = arith.truncf %67 : vector<4x16x128xf32> to vector<4x16x128xbf16>
    %69 = vector.shape_cast %68 : vector<4x16x128xbf16> to vector<64x128xbf16>
    %cst_21 = arith.constant dense<0.000000e+00> : vector<64x8xf32>
    %70 = tpu.matmul %69, %64, %cst_21 {dimension_numbers = #tpu.dot_dimension_numbers<[1], [0], [0], [1], [0, 0, 1, 1], [], []>} : vector<64x128xbf16>, vector<128x8xbf16>, vector<64x8xf32> -> vector<64x8xf32>
    %71 = vector.shape_cast %70 : vector<64x8xf32> to vector<4x16x8xf32>
    %cst_22 = arith.constant dense<0xFF800000> : vector<4x8xf32>
    %72 = vector.multi_reduction <maximumf>, %71, %cst_22 [1] : vector<4x16x8xf32> to vector<4x8xf32>
    %73 = vector.shape_cast %72 : vector<4x8xf32> to vector<4x1x8xf32>
    %74 = vector.broadcast %73 : vector<4x1x8xf32> to vector<4x16x8xf32>
    %75 = arith.subf %71, %74 : vector<4x16x8xf32>
    %76 = math.exp %75 : vector<4x16x8xf32>
    %cst_23 = arith.constant dense<0.000000e+00> : vector<4x8xf32>
    %77 = vector.multi_reduction <add>, %76, %cst_23 [1] : vector<4x16x8xf32> to vector<4x8xf32>
    %78 = vector.shape_cast %77 : vector<4x8xf32> to vector<4x1x8xf32>
    %79 = tpu.reciprocal %78 {approx = true} : vector<4x1x8xf32> -> vector<4x1x8xf32>
    %80 = vector.broadcast %79 : vector<4x1x8xf32> to vector<4x16x8xf32>
    %81 = arith.mulf %76, %80 : vector<4x16x8xf32>
    %82 = arith.truncf %81 : vector<4x16x8xf32> to vector<4x16x8xbf16>
    %83 = vector.shape_cast %82 : vector<4x16x8xbf16> to vector<64x8xbf16>
    %cst_24 = arith.constant dense<0.000000e+00> : vector<64x128xf32>
    %84 = tpu.matmul %83, %52, %cst_24 {dimension_numbers = #tpu.dot_dimension_numbers<[1], [0], [0], [1], [0, 0, 1, 1], [], []>} : vector<64x8xbf16>, vector<8x128xbf16>, vector<64x128xf32> -> vector<64x128xf32>
    %85 = vector.shape_cast %84 : vector<64x128xf32> to vector<4x16x128xf32>
    %86 = arith.mulf %85, %40 : vector<4x16x128xf32>
    %cst_25 = arith.constant dense<0.000000e+00> : vector<4x128xf32>
    %87 = vector.multi_reduction <add>, %86, %cst_25 [1] : vector<4x16x128xf32> to vector<4x128xf32>
    %88 = arith.truncf %87 : vector<4x128xf32> to vector<4x128xbf16>
    %c0_26 = arith.constant 0 : index
    %c0_27 = arith.constant 0 : index
    %89 = vector.load %arg3[%c0_26, %c0_27] : memref<128x128xbf16, #tpu.memory_space<vmem>>, vector<128x128xbf16>
    %cst_28 = arith.constant dense<0.000000e+00> : vector<4x128xf32>
    %90 = tpu.matmul %88, %89, %cst_28 {dimension_numbers = #tpu.dot_dimension_numbers<[1], [0], [0], [1], [0, 0, 1, 1], [], []>} : vector<4x128xbf16>, vector<128x128xbf16>, vector<4x128xf32> -> vector<4x128xf32>
    %91 = vector.broadcast %5 : vector<1x128xf32> to vector<4x128xf32>
    %92 = arith.addf %90, %91 : vector<4x128xf32>
    %93 = vector.shape_cast %92 : vector<4x128xf32> to vector<4x1x128xf32>
    %94 = vector.broadcast %93 : vector<4x1x128xf32> to vector<4x16x128xf32>
    %95 = arith.addf %0, %94 : vector<4x16x128xf32>
    %cst_29 = arith.constant dense<0.000000e+00> : vector<4x16xf32>
    %96 = vector.multi_reduction <add>, %95, %cst_29 [2] : vector<4x16x128xf32> to vector<4x16xf32>
    %97 = vector.shape_cast %96 : vector<4x16xf32> to vector<4x16x1xf32>
    %cst_30 = arith.constant 1.280000e+02 : f32
    %98 = vector.broadcast %cst_30 : f32 to vector<4x16x1xf32>
    %99 = arith.divf %97, %98 : vector<4x16x1xf32>
    %100 = vector.broadcast %99 : vector<4x16x1xf32> to vector<4x16x128xf32>
    %101 = arith.subf %95, %100 : vector<4x16x128xf32>
    %102 = arith.mulf %101, %101 : vector<4x16x128xf32>
    %cst_31 = arith.constant dense<0.000000e+00> : vector<4x16xf32>
    %103 = vector.multi_reduction <add>, %102, %cst_31 [2] : vector<4x16x128xf32> to vector<4x16xf32>
    %104 = vector.shape_cast %103 : vector<4x16xf32> to vector<4x16x1xf32>
    %cst_32 = arith.constant 1.280000e+02 : f32
    %105 = vector.broadcast %cst_32 : f32 to vector<4x16x1xf32>
    %106 = arith.divf %104, %105 : vector<4x16x1xf32>
    %cst_33 = arith.constant 9.99999974E-6 : f32
    %107 = vector.broadcast %cst_33 : f32 to vector<4x16x1xf32>
    %108 = arith.addf %106, %107 : vector<4x16x1xf32>
    %109 = math.rsqrt %108 : vector<4x16x1xf32>
    %110 = vector.broadcast %109 : vector<4x16x1xf32> to vector<4x16x128xf32>
    %111 = arith.mulf %101, %110 : vector<4x16x128xf32>
    %112 = vector.broadcast %7 : vector<1x1x128xf32> to vector<4x16x128xf32>
    %113 = arith.mulf %111, %112 : vector<4x16x128xf32>
    %114 = vector.broadcast %9 : vector<1x1x128xf32> to vector<4x16x128xf32>
    %115 = arith.addf %113, %114 : vector<4x16x128xf32>
    %116 = arith.truncf %115 : vector<4x16x128xf32> to vector<4x16x128xbf16>
    %117 = vector.shape_cast %116 : vector<4x16x128xbf16> to vector<64x128xbf16>
    %c0_34 = arith.constant 0 : index
    %c0_35 = arith.constant 0 : index
    %118 = vector.load %arg4[%c0_34, %c0_35] : memref<128x512xbf16, #tpu.memory_space<vmem>>, vector<128x512xbf16>
    %cst_36 = arith.constant dense<0.000000e+00> : vector<64x512xf32>
    %119 = tpu.matmul %117, %118, %cst_36 {dimension_numbers = #tpu.dot_dimension_numbers<[1], [0], [0], [1], [0, 0, 1, 1], [], []>} : vector<64x128xbf16>, vector<128x512xbf16>, vector<64x512xf32> -> vector<64x512xf32>
    %120 = vector.broadcast %11 : vector<1x512xf32> to vector<64x512xf32>
    %121 = arith.addf %119, %120 : vector<64x512xf32>
    %122 = arith.mulf %121, %121 : vector<64x512xf32>
    %123 = arith.mulf %122, %121 : vector<64x512xf32>
    %cst_37 = arith.constant 4.471500e-02 : f32
    %124 = vector.broadcast %cst_37 : f32 to vector<64x512xf32>
    %125 = arith.mulf %124, %123 : vector<64x512xf32>
    %126 = arith.addf %121, %125 : vector<64x512xf32>
    %cst_38 = arith.constant 1.59576917 : f32
    %127 = vector.broadcast %cst_38 : f32 to vector<64x512xf32>
    %128 = arith.mulf %127, %126 : vector<64x512xf32>
    %129 = arith.negf %128 : vector<64x512xf32>
    %130 = math.exp %129 : vector<64x512xf32>
    %cst_39 = arith.constant 1.000000e+00 : f32
    %131 = vector.broadcast %cst_39 : f32 to vector<64x512xf32>
    %132 = arith.addf %131, %130 : vector<64x512xf32>
    %133 = arith.divf %131, %132 : vector<64x512xf32>
    %134 = arith.mulf %121, %133 : vector<64x512xf32>
    %135 = arith.truncf %134 : vector<64x512xf32> to vector<64x512xbf16>
    %c0_40 = arith.constant 0 : index
    %c0_41 = arith.constant 0 : index
    %136 = vector.load %arg5[%c0_40, %c0_41] : memref<512x128xbf16, #tpu.memory_space<vmem>>, vector<512x128xbf16>
    %cst_42 = arith.constant dense<0.000000e+00> : vector<64x128xf32>
    %137 = tpu.matmul %135, %136, %cst_42 {dimension_numbers = #tpu.dot_dimension_numbers<[1], [0], [0], [1], [0, 0, 1, 1], [], []>} : vector<64x512xbf16>, vector<512x128xbf16>, vector<64x128xf32> -> vector<64x128xf32>
    %138 = vector.broadcast %10 : vector<1x128xf32> to vector<64x128xf32>
    %139 = arith.addf %137, %138 : vector<64x128xf32>
    %140 = vector.shape_cast %139 : vector<64x128xf32> to vector<4x16x128xf32>
    %141 = arith.addf %95, %140 : vector<4x16x128xf32>
    %c0_43 = arith.constant 0 : index
    %c0_44 = arith.constant 0 : index
    %c0_45 = arith.constant 0 : index
    %142 = vector.load %arg8[%c0_43, %c0_44, %c0_45] : memref<4x16x128xf32, #tpu.memory_space<vmem>>, vector<4x16x128xf32>
    tpu.vector_store %arg8[%c0_43, %c0_44, %c0_45], %141 {strides = array<i32>} : memref<4x16x128xf32, #tpu.memory_space<vmem>>, vector<4x16x128xf32>,
    return
  }
  func.func @transform_0(%arg0: i32) -> (i32, i32, i32) {
    %c0_i32 = arith.constant 0 : i32
    %c0_i32_0 = arith.constant 0 : i32
    %c0_i32_1 = arith.constant 0 : i32
    return %arg0, %c0_i32, %c0_i32_0 : i32, i32, i32
  }
  func.func @transform_1(%arg0: i32) -> (i32, i32) {
    %c0_i32 = arith.constant 0 : i32
    %c0_i32_0 = arith.constant 0 : i32
    %c0_i32_1 = arith.constant 0 : i32
    return %c0_i32, %c0_i32_0 : i32, i32
  }
  func.func @transform_2(%arg0: i32) -> (i32, i32) {
    %c0_i32 = arith.constant 0 : i32
    %c0_i32_0 = arith.constant 0 : i32
    %c0_i32_1 = arith.constant 0 : i32
    return %c0_i32, %c0_i32_0 : i32, i32
  }
  func.func @transform_3(%arg0: i32) -> (i32, i32) {
    %c0_i32 = arith.constant 0 : i32
    %c0_i32_0 = arith.constant 0 : i32
    %c0_i32_1 = arith.constant 0 : i32
    return %c0_i32, %c0_i32_0 : i32, i32
  }
  func.func @transform_4(%arg0: i32) -> (i32, i32) {
    %c0_i32 = arith.constant 0 : i32
    %c0_i32_0 = arith.constant 0 : i32
    %c0_i32_1 = arith.constant 0 : i32
    return %c0_i32, %c0_i32_0 : i32, i32
  }
  func.func @transform_5(%arg0: i32) -> (i32, i32) {
    %c0_i32 = arith.constant 0 : i32
    %c0_i32_0 = arith.constant 0 : i32
    %c0_i32_1 = arith.constant 0 : i32
    return %c0_i32, %c0_i32_0 : i32, i32
  }
  func.func @transform_6(%arg0: i32) -> (i32, i32) {
    %c0_i32 = arith.constant 0 : i32
    %c0_i32_0 = arith.constant 0 : i32
    %c0_i32_1 = arith.constant 0 : i32
    return %c0_i32, %c0_i32_0 : i32, i32
  }
  func.func @transform_7(%arg0: i32) -> (i32, i32, i32) {
    %c0_i32 = arith.constant 0 : i32
    %c0_i32_0 = arith.constant 0 : i32
    %c0_i32_1 = arith.constant 0 : i32
    return %arg0, %c0_i32, %c0_i32_0 : i32, i32, i32
  }
}

</mosaic_0001>

<llo_original>
// kernel: tpu_custom_call.1
$region0: #{tpu_custom_call.1}
  #allocation0 [shape = 'u32[]', space=smem, size = 0x4, offset = 0x4, fixed_abs, tag = 'smem constant byte address 0x4 - core index']
  #allocation1 [shape = 'u32[72,128]{1,0:T(1,128)}', space=vmem, size = 0x9000, scoped, tag = 'internal scratch']
  %s0 = inlined_call_operand.hbm [shape: f32[4,16,128], index: 0, kind: input, shape index: {}]
  %s1 = inlined_call_operand.hbm [shape: bf16[128,384], index: 1, kind: input, shape index: {}]
  %s2 = inlined_call_operand.hbm [shape: bf16[128,128], index: 2, kind: input, shape index: {}]
  %s3 = inlined_call_operand.hbm [shape: bf16[128,512], index: 3, kind: input, shape index: {}]
  %s4 = inlined_call_operand.hbm [shape: bf16[512,128], index: 4, kind: input, shape index: {}]
  %s5 = inlined_call_operand.hbm [shape: f32[6,128], index: 5, kind: input, shape index: {}]
  %s6 = inlined_call_operand.vmem [shape: f32[1,512], index: 6, kind: input, shape index: {}]
  %s7 = inlined_call_operand.hbm [shape: f32[4,16,128], index: 7, kind: output, shape index: {}]
  %s8 = sld [smem:[#allocation0]]
  $region62: #{tpu_custom_call.1} parent=0
    _
  %s10 = ssub.s32 1, %s8
  %s11 = scalar_select 0, %s10, %s8
  $region1: #{tpu_custom_call.1} parent=0
    #allocation2 [shape = 'u8[32768]{0}', space=vmem, size = 0x8000, scoped, tag = 'input window, operand 0, single buffered']
    #allocation3 [shape = 's32[1]{0}', space=sflag, size = 0x4, scoped, tag = 'scoped memory for tpu_custom_call.1']
    #allocation4 [shape = 's32[1]{0}', space=sflag, size = 0x4, scoped, tag = 'scoped memory for tpu_custom_call.1']
    #allocation5 [shape = 'u8[98304]{0}', space=vmem, size = 0x18000, scoped, tag = 'input window, operand 1, single buffered']
    #allocation6 [shape = 's32[1]{0}', space=sflag, size = 0x4, scoped, tag = 'scoped memory for tpu_custom_call.1']
    #allocation7 [shape = 'u8[32768]{0}', space=vmem, size = 0x8000, scoped, tag = 'input window, operand 2, single buffered']
    #allocation8 [shape = 'u8[131072]{0}', space=vmem, size = 0x20000, scoped, tag = 'input window, operand 3, single buffered']
    #allocation9 [shape = 's32[1]{0}', space=sflag, size = 0x4, scoped, tag = 'scoped memory for tpu_custom_call.1']
    #allocation10 [shape = 'u8[131072]{0}', space=vmem, size = 0x20000, scoped, tag = 'input window, operand 4, single buffered']
    #allocation11 [shape = 'u8[4096]{0}', space=vmem, size = 0x1000, scoped, tag = 'input window, operand 5, single buffered']
    #allocation12 [shape = 's32[1]{0}', space=sflag, size = 0x4, scoped, tag = 'scoped memory for tpu_custom_call.1']
    #allocation13 [shape = 'u8[32768]{0}', space=vmem, size = 0x8000, scoped, tag = 'output window, operand 0, single buffered']
    %12 = vsyncpa [#allocation3], 0
    %13 = vsyncpa [#allocation6], 0
    %14 = vsyncpa [#allocation9], 0
    %15 = vsyncpa [#allocation12], 0
    %16 = vsyncpa [#allocation4], 0
    // Predicated region
    $region2: #{tpu_custom_call.1} parent=1 // pred_check
      _
    $region3: #{tpu_custom_call.1} parent=1 // pred_check_branch
      %18 = sbr.rel (0) target = $region5
    $region4: #{tpu_custom_call.1} parent=1 // pred_region
      %20 = vsyncadd [#allocation3], 0
      %s21 = sshll.u32 %s0, 4
      %s22 = int_to_ptr.hbm [resolvable:$true] %s21
      %s23 = sshll.u32 [#allocation2], 4
      %s24 = int_to_ptr.vmem [resolvable:$true] %s23
      %29 = dma.hbm_to_vmem [thread:$0]  %s22, 1024, %s24, [#allocation3], 128, 128, 8
    $region5: #{tpu_custom_call.1} parent=1 // pred_fallthru
      _
    // Predicated region
    $region6: #{tpu_custom_call.1} parent=1 // pred_check
      _
    $region7: #{tpu_custom_call.1} parent=1 // pred_check_branch
      %31 = sbr.rel (0) target = $region9
    $region8: #{tpu_custom_call.1} parent=1 // pred_region
      %33 = vsyncadd [#allocation6], 0
      %s34 = sshll.u32 %s1, 4
      %s35 = int_to_ptr.hbm [resolvable:$true] %s34
      %s36 = sshll.u32 [#allocation5], 4
      %s37 = int_to_ptr.vmem [resolvable:$true] %s36
      %42 = dma.hbm_to_vmem [thread:$0]  %s35, 3072, %s37, [#allocation6], 192, 192, 12
    $region9: #{tpu_custom_call.1} parent=1 // pred_fallthru
      _
    // Predicated region
    $region10: #{tpu_custom_call.1} parent=1 // pred_check
      _
    $region11: #{tpu_custom_call.1} parent=1 // pred_check_branch
      %44 = sbr.rel (0) target = $region13
    $region12: #{tpu_custom_call.1} parent=1 // pred_region
      %46 = vsyncadd [#allocation6], 0
      %s47 = sshll.u32 %s2, 4
      %s48 = int_to_ptr.hbm [resolvable:$true] %s47
      %s49 = sshll.u32 [#allocation7], 4
      %s50 = int_to_ptr.vmem [resolvable:$true] %s49
      %55 = dma.hbm_to_vmem [thread:$0]  %s48, 1024, %s50, [#allocation6], 64, 64, 4
    $region13: #{tpu_custom_call.1} parent=1 // pred_fallthru
      _
    // Predicated region
    $region14: #{tpu_custom_call.1} parent=1 // pred_check
      _
    $region15: #{tpu_custom_call.1} parent=1 // pred_check_branch
      %57 = sbr.rel (0) target = $region17
    $region16: #{tpu_custom_call.1} parent=1 // pred_region
      %59 = vsyncadd [#allocation9], 0
      %s60 = sshll.u32 %s3, 4
      %s61 = int_to_ptr.hbm [resolvable:$true] %s60
      %s62 = sshll.u32 [#allocation8], 4
      %s63 = int_to_ptr.vmem [resolvable:$true] %s62
      %68 = dma.hbm_to_vmem [thread:$0]  %s61, 4096, %s63, [#allocation9], 256, 256, 16
    $region17: #{tpu_custom_call.1} parent=1 // pred_fallthru
      _
    // Predicated region
    $region18: #{tpu_custom_call.1} parent=1 // pred_check
      _
    $region19: #{tpu_custom_call.1} parent=1 // pred_check_branch
      %70 = sbr.rel (0) target = $region21
    $region20: #{tpu_custom_call.1} parent=1 // pred_region
      %72 = vsyncadd [#allocation9], 0
      %s73 = sshll.u32 %s4, 4
      %s74 = int_to_ptr.hbm [resolvable:$true] %s73
      %s75 = sshll.u32 [#allocation10], 4
      %s76 = int_to_ptr.vmem [resolvable:$true] %s75
      %81 = dma.hbm_to_vmem [thread:$0]  %s74, 4096, %s76, [#allocation9], 64, 64, 4
    $region21: #{tpu_custom_call.1} parent=1 // pred_fallthru
      _
    // Predicated region
    $region22: #{tpu_custom_call.1} parent=1 // pred_check
      _
    $region23: #{tpu_custom_call.1} parent=1 // pred_check_branch
      %83 = sbr.rel (0) target = $region25
    $region24: #{tpu_custom_call.1} parent=1 // pred_region
      %85 = vsyncadd [#allocation12], 0
      %s87 = sshll.u32 %s5, 4
      %s88 = int_to_ptr.hbm [resolvable:$true] %s87
      %s89 = sshll.u32 [#allocation11], 4
      %s90 = int_to_ptr.vmem [resolvable:$true] %s89
      %92 = dma.hbm_to_vmem [thread:$0]  %s88, 128, %s90, [#allocation12]
    $region25: #{tpu_custom_call.1} parent=1 // pred_fallthru
      _
    // Predicated region
    $region26: #{tpu_custom_call.1} parent=1 // pred_check
      _
    $region27: #{tpu_custom_call.1} parent=1 // pred_check_branch
      %94 = sbr.rel (0) target = $region29
    $region28: #{tpu_custom_call.1} parent=1 // pred_region
      _
    $region29: #{tpu_custom_call.1} parent=1 // pred_fallthru
      _
    // Predicated region
    $region30: #{tpu_custom_call.1} parent=1 // pred_check
      _
    $region31: #{tpu_custom_call.1} parent=1 // pred_check_branch
      %96 = sbr.rel (0) target = $region33
    $region32: #{tpu_custom_call.1} parent=1 // pred_region
      %98 = dma.done [#allocation3], 1024
    $region33: #{tpu_custom_call.1} parent=1 // pred_fallthru
      _
    // Predicated region
    $region34: #{tpu_custom_call.1} parent=1 // pred_check
      _
    $region35: #{tpu_custom_call.1} parent=1 // pred_check_branch
      %100 = sbr.rel (0) target = $region37
    $region36: #{tpu_custom_call.1} parent=1 // pred_region
      %102 = dma.done [#allocation6], 3072
    $region37: #{tpu_custom_call.1} parent=1 // pred_fallthru
      _
    // Predicated region
    $region38: #{tpu_custom_call.1} parent=1 // pred_check
      _
    $region39: #{tpu_custom_call.1} parent=1 // pred_check_branch
      %104 = sbr.rel (0) target = $region41
    $region40: #{tpu_custom_call.1} parent=1 // pred_region
      %106 = dma.done [#allocation6], 1024
    $region41: #{tpu_custom_call.1} parent=1 // pred_fallthru
      _
    // Predicated region
    $region42: #{tpu_custom_call.1} parent=1 // pred_check
      _
    $region43: #{tpu_custom_call.1} parent=1 // pred_check_branch
      %108 = sbr.rel (0) target = $region45
    $region44: #{tpu_custom_call.1} parent=1 // pred_region
      %110 = dma.done [#allocation9], 4096
    $region45: #{tpu_custom_call.1} parent=1 // pred_fallthru
      _
    // Predicated region
    $region46: #{tpu_custom_call.1} parent=1 // pred_check
      _
    $region47: #{tpu_custom_call.1} parent=1 // pred_check_branch
      %112 = sbr.rel (0) target = $region49
    $region48: #{tpu_custom_call.1} parent=1 // pred_region
      %114 = dma.done [#allocation9], 4096
    $region49: #{tpu_custom_call.1} parent=1 // pred_fallthru
      _
    // Predicated region
    $region50: #{tpu_custom_call.1} parent=1 // pred_check
      _
    $region51: #{tpu_custom_call.1} parent=1 // pred_check_branch
      %116 = sbr.rel (0) target = $region53
    $region52: #{tpu_custom_call.1} parent=1 // pred_region
      %118 = dma.done [#allocation12], 128
    $region53: #{tpu_custom_call.1} parent=1 // pred_fallthru
      _
    %v120 = vld [vmem:[#allocation2] sm:$0xff]
    %v121 = vld [vmem:[#allocation2 + $0x8] sm:$0xff]
    %v122 = vld [vmem:[#allocation2 + $0x10] sm:$0xff]
    %v123 = vld [vmem:[#allocation2 + $0x18] sm:$0xff]
    %v124 = vld [vmem:[#allocation2 + $0x20] sm:$0xff]
    %v125 = vld [vmem:[#allocation2 + $0x28] sm:$0xff]
    %v126 = vld [vmem:[#allocation2 + $0x30] sm:$0xff]
    %v127 = vld [vmem:[#allocation2 + $0x38] sm:$0xff]
    %v128 = vld [vmem:[#allocation11] sm:$0x1]
    %v129 = vld [vmem:[#allocation11 + $0x1] sm:$0x1]
    %v130 = vld [vmem:[#allocation11 + $0x2] sm:$0x1]
    %v131 = vld [vmem:[#allocation11 + $0x3] sm:$0x1]
    %v132 = vld [vmem:[#allocation11 + $0x4] sm:$0x1]
    %v133 = vld [vmem:[#allocation11 + $0x5] sm:$0x1]
    %v134 = vld [vmem:[%s6] sm:$0xf]
    %135 = vadd.xlane.f32.xlu0 %v120
    %v136 = vpop.xlane.xlu0 %135
    %137 = vadd.xlane.f32.xlu0 %v121
    %v138 = vpop.xlane.xlu0 %137
    %139 = vadd.xlane.f32.xlu0 %v122
    %v140 = vpop.xlane.xlu0 %139
    %141 = vadd.xlane.f32.xlu0 %v123
    %v142 = vpop.xlane.xlu0 %141
    %143 = vadd.xlane.f32.xlu0 %v124
    %v144 = vpop.xlane.xlu0 %143
    %145 = vadd.xlane.f32.xlu0 %v125
    %v146 = vpop.xlane.xlu0 %145
    %147 = vadd.xlane.f32.xlu0 %v126
    %v148 = vpop.xlane.xlu0 %147
    %149 = vadd.xlane.f32.xlu0 %v127
    %v150 = vpop.xlane.xlu0 %149
    %v151 = vrcp.pop 128.0
    %v152 = vmul.f32 128.0, %v151
    %v153 = vsub.f32 1.0, %v152
    %v154 = vmul.f32 %v151, %v153
    %v155 = vadd.f32 %v151, %v154
    %vm156 = vweird.f32 %v151
    %v157 = vsel %vm156, %v151, %v155
    %v158 = vmul.f32 %v136, %v157
    %v159 = vmul.f32 %v138, %v157
    %v160 = vmul.f32 %v140, %v157
    %v161 = vmul.f32 %v142, %v157
    %v162 = vmul.f32 %v144, %v157
    %v163 = vmul.f32 %v146, %v157
    %v164 = vmul.f32 %v148, %v157
    %v165 = vmul.f32 %v150, %v157
    %v166 = vsub.f32 %v120, %v158
    %v167 = vsub.f32 %v121, %v159
    %v168 = vsub.f32 %v122, %v160
    %v169 = vsub.f32 %v123, %v161
    %v170 = vsub.f32 %v124, %v162
    %v171 = vsub.f32 %v125, %v163
    %v172 = vsub.f32 %v126, %v164
    %v173 = vsub.f32 %v127, %v165
    %v174 = vmul.f32 %v166, %v166
    %v175 = vmul.f32 %v167, %v167
    %v176 = vmul.f32 %v168, %v168
    %v177 = vmul.f32 %v169, %v169
    %v178 = vmul.f32 %v170, %v170
    %v179 = vmul.f32 %v171, %v171
    %v180 = vmul.f32 %v172, %v172
    %v181 = vmul.f32 %v173, %v173
    %182 = vadd.xlane.f32.xlu0 %v174
    %v183 = vpop.xlane.xlu0 %182
    %184 = vadd.xlane.f32.xlu0 %v175
    %v185 = vpop.xlane.xlu0 %184
    %186 = vadd.xlane.f32.xlu0 %v176
    %v187 = vpop.xlane.xlu0 %186
    %188 = vadd.xlane.f32.xlu0 %v177
    %v189 = vpop.xlane.xlu0 %188
    %190 = vadd.xlane.f32.xlu0 %v178
    %v191 = vpop.xlane.xlu0 %190
    %192 = vadd.xlane.f32.xlu0 %v179
    %v193 = vpop.xlane.xlu0 %192
    %194 = vadd.xlane.f32.xlu0 %v180
    %v195 = vpop.xlane.xlu0 %194
    %196 = vadd.xlane.f32.xlu0 %v181
    %v197 = vpop.xlane.xlu0 %196
    %v198 = vmul.f32 %v183, %v157
    %v199 = vmul.f32 %v185, %v157
    %v200 = vmul.f32 %v187, %v157
    %v201 = vmul.f32 %v189, %v157
    %v202 = vmul.f32 %v191, %v157
    %v203 = vmul.f32 %v193, %v157
    %v204 = vmul.f32 %v195, %v157
    %v205 = vmul.f32 %v197, %v157
    %v206 = vadd.f32 %v198, 1e-05
    %v207 = vadd.f32 %v199, 1e-05
    %v208 = vadd.f32 %v200, 1e-05
    %v209 = vadd.f32 %v201, 1e-05
    %v210 = vadd.f32 %v202, 1e-05
    %v211 = vadd.f32 %v203, 1e-05
    %v212 = vadd.f32 %v204, 1e-05
    %v213 = vadd.f32 %v205, 1e-05
    %v214 = vrsqrt.pop %v206
    %v215 = vmul.f32 %v214, %v206
    %v216 = vmul.f32 %v215, %v214
    %v217 = vmul.f32 0.5, %v216
    %v218 = vsub.f32 1.5, %v217
    %v219 = vmul.f32 %v214, %v218
    %vm220 = vweird.f32 %v206
    %vm221 = vweird.f32 %v214
    %vm222 = vmor %vm220, %vm221
    %v223 = vsel %vm222, %v214, %v219
    %v224 = vrsqrt.pop %v207
    %v225 = vmul.f32 %v224, %v207
    %v226 = vmul.f32 %v225, %v224
    %v227 = vmul.f32 0.5, %v226
    %v228 = vsub.f32 1.5, %v227
    %v229 = vmul.f32 %v224, %v228
    %vm230 = vweird.f32 %v207
    %vm231 = vweird.f32 %v224
    %vm232 = vmor %vm230, %vm231
    %v233 = vsel %vm232, %v224, %v229
    %v234 = vrsqrt.pop %v208
    %v235 = vmul.f32 %v234, %v208
    %v236 = vmul.f32 %v235, %v234
    %v237 = vmul.f32 0.5, %v236
    %v238 = vsub.f32 1.5, %v237
    %v239 = vmul.f32 %v234, %v238
    %vm240 = vweird.f32 %v208
    %vm241 = vweird.f32 %v234
    %vm242 = vmor %vm240, %vm241
    %v243 = vsel %vm242, %v234, %v239
    %v244 = vrsqrt.pop %v209
    %v245 = vmul.f32 %v244, %v209
    %v246 = vmul.f32 %v245, %v244
    %v247 = vmul.f32 0.5, %v246
    %v248 = vsub.f32 1.5, %v247
    %v249 = vmul.f32 %v244, %v248
    %vm250 = vweird.f32 %v209
    %vm251 = vweird.f32 %v244
    %vm252 = vmor %vm250, %vm251
    %v253 = vsel %vm252, %v244, %v249
    %v254 = vrsqrt.pop %v210
    %v255 = vmul.f32 %v254, %v210
    %v256 = vmul.f32 %v255, %v254
    %v257 = vmul.f32 0.5, %v256
    %v258 = vsub.f32 1.5, %v257
    %v259 = vmul.f32 %v254, %v258
    %vm260 = vweird.f32 %v210
    %vm261 = vweird.f32 %v254
    %vm262 = vmor %vm260, %vm261
    %v263 = vsel %vm262, %v254, %v259
    %v264 = vrsqrt.pop %v211
    %v265 = vmul.f32 %v264, %v211
    %v266 = vmul.f32 %v265, %v264
    %v267 = vmul.f32 0.5, %v266
    %v268 = vsub.f32 1.5, %v267
    %v269 = vmul.f32 %v264, %v268
    %vm270 = vweird.f32 %v211
    %vm271 = vweird.f32 %v264
    %vm272 = vmor %vm270, %vm271
    %v273 = vsel %vm272, %v264, %v269
    %v274 = vrsqrt.pop %v212
    %v275 = vmul.f32 %v274, %v212
    %v276 = vmul.f32 %v275, %v274
    %v277 = vmul.f32 0.5, %v276
    %v278 = vsub.f32 1.5, %v277
    %v279 = vmul.f32 %v274, %v278
    %vm280 = vweird.f32 %v212
    %vm281 = vweird.f32 %v274
    %vm282 = vmor %vm280, %vm281
    %v283 = vsel %vm282, %v274, %v279
    %v284 = vrsqrt.pop %v213
    %v285 = vmul.f32 %v284, %v213
    %v286 = vmul.f32 %v285, %v284
    %v287 = vmul.f32 0.5, %v286
    %v288 = vsub.f32 1.5, %v287
    %v289 = vmul.f32 %v284, %v288
    %vm290 = vweird.f32 %v213
    %vm291 = vweird.f32 %v284
    %vm292 = vmor %vm290, %vm291
    %v293 = vsel %vm292, %v284, %v289
    %v294 = vmul.f32 %v166, %v223
    %v295 = vmul.f32 %v167, %v233
    %v296 = vmul.f32 %v168, %v243
    %v297 = vmul.f32 %v169, %v253
    %v298 = vmul.f32 %v170, %v263
    %v299 = vmul.f32 %v171, %v273
    %v300 = vmul.f32 %v172, %v283
    %v301 = vmul.f32 %v173, %v293
    %v302 = vperm.slane %v128, 0
    %v303 = vmul.f32 %v294, %v302
    %v304 = vmul.f32 %v295, %v302
    %v305 = vmul.f32 %v296, %v302
    %v306 = vmul.f32 %v297, %v302
    %v307 = vmul.f32 %v298, %v302
    %v308 = vmul.f32 %v299, %v302
    %v309 = vmul.f32 %v300, %v302
    %v310 = vmul.f32 %v301, %v302
    %v311 = vperm.slane %v129, 0
    %v312 = vadd.f32 %v303, %v311
    %v313 = vadd.f32 %v304, %v311
    %v314 = vadd.f32 %v305, %v311
    %v315 = vadd.f32 %v306, %v311
    %v316 = vadd.f32 %v307, %v311
    %v317 = vadd.f32 %v308, %v311
    %v318 = vadd.f32 %v309, %v311
    %v319 = vadd.f32 %v310, %v311
    %v320 = vpack.c.bf16 %v312, %v312
    %v321 = vpack.c.bf16 %v313, %v313
    %v322 = vpack.c.bf16 %v314, %v314
    %v323 = vpack.c.bf16 %v315, %v315
    %v324 = vpack.c.bf16 %v316, %v316
    %v325 = vpack.c.bf16 %v317, %v317
    %v326 = vpack.c.bf16 %v318, %v318
    %v327 = vpack.c.bf16 %v319, %v319
    %v328 = vld [vmem:[#allocation5] sm:$0xff]
    %v329 = vld [vmem:[#allocation5 + $0x8] sm:$0xf]
    %v330 = vld [vmem:[#allocation5 + $0xc] sm:$0xff]
    %v331 = vld [vmem:[#allocation5 + $0x14] sm:$0xf]
    %v332 = vld [vmem:[#allocation5 + $0x18] sm:$0xff]
    %v333 = vld [vmem:[#allocation5 + $0x20] sm:$0xf]
    %v334 = vld [vmem:[#allocation5 + $0x24] sm:$0xff]
    %v335 = vld [vmem:[#allocation5 + $0x2c] sm:$0xf]
    %v336 = vld [vmem:[#allocation5 + $0x30] sm:$0xff]
    %v337 = vld [vmem:[#allocation5 + $0x38] sm:$0xf]
    %v338 = vld [vmem:[#allocation5 + $0x3c] sm:$0xff]
    %v339 = vld [vmem:[#allocation5 + $0x44] sm:$0xf]
    %v340 = vld [vmem:[#allocation5 + $0x48] sm:$0xff]
    %v341 = vld [vmem:[#allocation5 + $0x50] sm:$0xf]
    %v342 = vld [vmem:[#allocation5 + $0x54] sm:$0xff]
    %v343 = vld [vmem:[#allocation5 + $0x5c] sm:$0xf]
    %v344 = vld [vmem:[#allocation5 + $0x60] sm:$0xff]
    %v345 = vld [vmem:[#allocation5 + $0x68] sm:$0xf]
    %v346 = vld [vmem:[#allocation5 + $0x6c] sm:$0xff]
    %v347 = vld [vmem:[#allocation5 + $0x74] sm:$0xf]
    %v348 = vld [vmem:[#allocation5 + $0x78] sm:$0xff]
    %v349 = vld [vmem:[#allocation5 + $0x80] sm:$0xf]
    %v350 = vld [vmem:[#allocation5 + $0x84] sm:$0xff]
    %v351 = vld [vmem:[#allocation5 + $0x8c] sm:$0xf]
    %v352 = vld [vmem:[#allocation5 + $0x90] sm:$0xff]
    %v353 = vld [vmem:[#allocation5 + $0x98] sm:$0xf]
    %v354 = vld [vmem:[#allocation5 + $0x9c] sm:$0xff]
    %v355 = vld [vmem:[#allocation5 + $0xa4] sm:$0xf]
    %v356 = vld [vmem:[#allocation5 + $0xa8] sm:$0xff]
    %v357 = vld [vmem:[#allocation5 + $0xb0] sm:$0xf]
    %v358 = vld [vmem:[#allocation5 + $0xb4] sm:$0xff]
    %v359 = vld [vmem:[#allocation5 + $0xbc] sm:$0xf]
    %v368 = vunpack.c.l.b16 %v320
    %v369 = vunpack.c.l.b16 %v321
    %v370 = vunpack.c.l.b16 %v322
    %v371 = vunpack.c.l.b16 %v323
    %v372 = vunpack.c.l.b16 %v324
    %v373 = vunpack.c.l.b16 %v325
    %v374 = vunpack.c.l.b16 %v326
    %v375 = vunpack.c.l.b16 %v327
    %v376 = vpack.c.b16 %v369, %v368
    %v377 = vpack.c.b16 %v371, %v370
    %v378 = vpack.c.b16 %v373, %v372
    %v379 = vpack.c.b16 %v375, %v374
    %v416 = vunpack.c.l.b16 %v328
    %v417 = vunpack.c.h.b16 %v328
    %v418 = vunpack.c.l.b16 %v329
    %v419 = vunpack.c.l.b16 %v330
    %v420 = vunpack.c.h.b16 %v330
    %v421 = vunpack.c.l.b16 %v331
    %v422 = vunpack.c.l.b16 %v332
    %v423 = vunpack.c.h.b16 %v332
    %v424 = vunpack.c.l.b16 %v333
    %v425 = vunpack.c.l.b16 %v334
    %v426 = vunpack.c.h.b16 %v334
    %v427 = vunpack.c.l.b16 %v335
    %v428 = vunpack.c.l.b16 %v336
    %v429 = vunpack.c.h.b16 %v336
    %v430 = vunpack.c.l.b16 %v337
    %v431 = vunpack.c.l.b16 %v338
    %v432 = vunpack.c.h.b16 %v338
    %v433 = vunpack.c.l.b16 %v339
    %v434 = vunpack.c.l.b16 %v340
    %v435 = vunpack.c.h.b16 %v340
    %v436 = vunpack.c.l.b16 %v341
    %v437 = vunpack.c.l.b16 %v342
    %v438 = vunpack.c.h.b16 %v342
    %v439 = vunpack.c.l.b16 %v343
    %v440 = vunpack.c.l.b16 %v344
    %v441 = vunpack.c.h.b16 %v344
    %v442 = vunpack.c.l.b16 %v345
    %v443 = vunpack.c.l.b16 %v346
    %v444 = vunpack.c.h.b16 %v346
    %v445 = vunpack.c.l.b16 %v347
    %v446 = vunpack.c.l.b16 %v348
    %v447 = vunpack.c.h.b16 %v348
    %v448 = vunpack.c.l.b16 %v349
    %v449 = vunpack.c.l.b16 %v350
    %v450 = vunpack.c.h.b16 %v350
    %v451 = vunpack.c.l.b16 %v351
    %v452 = vunpack.c.l.b16 %v352
    %v453 = vunpack.c.h.b16 %v352
    %v454 = vunpack.c.l.b16 %v353
    %v455 = vunpack.c.l.b16 %v354
    %v456 = vunpack.c.h.b16 %v354
    %v457 = vunpack.c.l.b16 %v355
    %v458 = vunpack.c.l.b16 %v356
    %v459 = vunpack.c.h.b16 %v356
    %v460 = vunpack.c.l.b16 %v357
    %v461 = vunpack.c.l.b16 %v358
    %v462 = vunpack.c.h.b16 %v358
    %v463 = vunpack.c.l.b16 %v359
    %v464 = vpack.c.b16 %v419, %v416
    %v465 = vpack.c.b16 %v420, %v417
    %v466 = vpack.c.b16 %v421, %v418
    %v467 = vpack.c.b16 %v425, %v422
    %v468 = vpack.c.b16 %v426, %v423
    %v469 = vpack.c.b16 %v427, %v424
    %v470 = vpack.c.b16 %v431, %v428
    %v471 = vpack.c.b16 %v432, %v429
    %v472 = vpack.c.b16 %v433, %v430
    %v473 = vpack.c.b16 %v437, %v434
    %v474 = vpack.c.b16 %v438, %v435
    %v475 = vpack.c.b16 %v439, %v436
    %v476 = vpack.c.b16 %v443, %v440
    %v477 = vpack.c.b16 %v444, %v441
    %v478 = vpack.c.b16 %v445, %v442
    %v479 = vpack.c.b16 %v449, %v446
    %v480 = vpack.c.b16 %v450, %v447
    %v481 = vpack.c.b16 %v451, %v448
    %v482 = vpack.c.b16 %v455, %v452
    %v483 = vpack.c.b16 %v456, %v453
    %v484 = vpack.c.b16 %v457, %v454
    %v485 = vpack.c.b16 %v461, %v458
    %v486 = vpack.c.b16 %v462, %v459
    %v487 = vpack.c.b16 %v463, %v460
    %512 = vmatpush.bf16.msra.mxu0 %v485
    %513 = vmatpush.bf16.msra.mxu0 %v482
    %514 = vmatpush.bf16.msra.mxu0 %v479
    %515 = vmatpush.bf16.msra.mxu0 %v476
    %516 = vmatpush.bf16.msra.mxu0 %v473
    %517 = vmatpush.bf16.msra.mxu0 %v470
    %518 = vmatpush.bf16.msra.mxu0 %v467
    %519 = vmatpush.bf16.msra.mxu0 %v464
    %520 = vmatmul.bf16.gmra.mxu0 %v376
    %v521 = vpop.f32.mrf.mxu0
    %v522 = vadd.f32 0.0, %v521
    %v523 = vpop.f32.mrf.mxu0
    %524 = vmatmul.bf16.gmra.mxu0 %v377
    %v525 = vpop.f32.mrf.mxu0
    %v526 = vadd.f32 0.0, %v525
    %v527 = vpop.f32.mrf.mxu0
    %528 = vmatmul.bf16.gmra.mxu0 %v378
    %v529 = vpop.f32.mrf.mxu0
    %v530 = vadd.f32 0.0, %v529
    %v531 = vpop.f32.mrf.mxu0
    %532 = vmatmul.bf16.gmra.mxu0 %v379
    %v533 = vpop.f32.mrf.mxu0
    %v534 = vadd.f32 0.0, %v533
    %v535 = vpop.f32.mrf.mxu0
    %536 = vdwg.mxu0
    %537 = vmatpush.bf16.msra.mxu0 %v486
    %538 = vmatpush.bf16.msra.mxu0 %v483
    %539 = vmatpush.bf16.msra.mxu0 %v480
    %540 = vmatpush.bf16.msra.mxu0 %v477
    %541 = vmatpush.bf16.msra.mxu0 %v474
    %542 = vmatpush.bf16.msra.mxu0 %v471
    %543 = vmatpush.bf16.msra.mxu0 %v468
    %544 = vmatpush.bf16.msra.mxu0 %v465
    %545 = vmatmul.bf16.gmra.mxu0 %v376
    %v546 = vpop.f32.mrf.mxu0
    %v547 = vadd.f32 0.0, %v546
    %v548 = vpop.f32.mrf.mxu0
    %v549 = vadd.f32 0.0, %v548
    %550 = vmatmul.bf16.gmra.mxu0 %v377
    %v551 = vpop.f32.mrf.mxu0
    %v552 = vadd.f32 0.0, %v551
    %v553 = vpop.f32.mrf.mxu0
    %v554 = vadd.f32 0.0, %v553
    %555 = vmatmul.bf16.gmra.mxu0 %v378
    %v556 = vpop.f32.mrf.mxu0
    %v557 = vadd.f32 0.0, %v556
    %v558 = vpop.f32.mrf.mxu0
    %v559 = vadd.f32 0.0, %v558
    %560 = vmatmul.bf16.gmra.mxu0 %v379
    %v561 = vpop.f32.mrf.mxu0
    %v562 = vadd.f32 0.0, %v561
    %v563 = vpop.f32.mrf.mxu0
    %v564 = vadd.f32 0.0, %v563
    %565 = vdwg.mxu0
    %566 = vmatpush.bf16.msra.mxu0 %v487
    %567 = vmatpush.bf16.msra.mxu0 %v484
    %568 = vmatpush.bf16.msra.mxu0 %v481
    %569 = vmatpush.bf16.msra.mxu0 %v478
    %570 = vmatpush.bf16.msra.mxu0 %v475
    %571 = vmatpush.bf16.msra.mxu0 %v472
    %572 = vmatpush.bf16.msra.mxu0 %v469
    %573 = vmatpush.bf16.msra.mxu0 %v466
    %574 = vmatmul.bf16.gmra.mxu0 %v376
    %v575 = vpop.f32.mrf.mxu0
    %v576 = vadd.f32 0.0, %v575
    %v577 = vpop.f32.mrf.mxu0
    %v578 = vadd.f32 0.0, %v577
    %579 = vmatmul.bf16.gmra.mxu0 %v377
    %v580 = vpop.f32.mrf.mxu0
    %v581 = vadd.f32 0.0, %v580
    %v582 = vpop.f32.mrf.mxu0
    %v583 = vadd.f32 0.0, %v582
    %584 = vmatmul.bf16.gmra.mxu0 %v378
    %v585 = vpop.f32.mrf.mxu0
    %v586 = vadd.f32 0.0, %v585
    %v587 = vpop.f32.mrf.mxu0
    %v588 = vadd.f32 0.0, %v587
    %589 = vmatmul.bf16.gmra.mxu0 %v379
    %v590 = vpop.f32.mrf.mxu0
    %v591 = vadd.f32 0.0, %v590
    %v592 = vpop.f32.mrf.mxu0
    %v593 = vadd.f32 0.0, %v592
    %594 = vdwg.mxu0
    %v595 = vlaneseq
    %v596 = vshrl.u32 %v595, 7
    %v597 = vlaneseq
    %v598 = vand.u32 %v597, 127
    %v599 = vmul.u32 %v596, 16
    %vm600 = vcmp.ge.s32.totalorder %v598, %v599
    %v601 = vadd.s32 %v599, 16
    %vm602 = vcmp.lt.s32.totalorder %v598, %v601
    %vm603 = vmand %vm600, %vm602
    %v604 = vsel %vm603, 1, 0
    %v605 = vcvt.s32.f32 %v604
    %v606 = vpack.c.bf16 %v605, %v605
    %v607 = vadd.s32 %v596, 8
    %v608 = vadd.s32 %v596, 16
    %v609 = vadd.s32 %v596, 24
    %v610 = vadd.s32 %v596, 32
    %v611 = vadd.s32 %v596, 40
    %v612 = vadd.s32 %v596, 48
    %v613 = vadd.s32 %v596, 56
    %v614 = vadd.s32 %v596, 64
    %v615 = vadd.s32 %v596, 72
    %v616 = vadd.s32 %v596, 80
    %v617 = vadd.s32 %v596, 88
    %v618 = vadd.s32 %v596, 96
    %v619 = vadd.s32 %v596, 104
    %v620 = vadd.s32 %v596, 112
    %v621 = vadd.s32 %v596, 120
    %v622 = vmul.u32 %v598, 16
    %vm623 = vcmp.ge.s32.totalorder %v596, %v622
    %vm624 = vcmp.ge.s32.totalorder %v607, %v622
    %vm625 = vcmp.ge.s32.totalorder %v608, %v622
    %vm626 = vcmp.ge.s32.totalorder %v609, %v622
    %vm627 = vcmp.ge.s32.totalorder %v610, %v622
    %vm628 = vcmp.ge.s32.totalorder %v611, %v622
    %vm629 = vcmp.ge.s32.totalorder %v612, %v622
    %vm630 = vcmp.ge.s32.totalorder %v613, %v622
    %vm631 = vcmp.ge.s32.totalorder %v614, %v622
    %vm632 = vcmp.ge.s32.totalorder %v615, %v622
    %vm633 = vcmp.ge.s32.totalorder %v616, %v622
    %vm634 = vcmp.ge.s32.totalorder %v617, %v622
    %vm635 = vcmp.ge.s32.totalorder %v618, %v622
    %vm636 = vcmp.ge.s32.totalorder %v619, %v622
    %vm637 = vcmp.ge.s32.totalorder %v620, %v622
    %vm638 = vcmp.ge.s32.totalorder %v621, %v622
    %v639 = vadd.s32 %v622, 16
    %vm640 = vcmp.lt.s32.totalorder %v596, %v639
    %vm641 = vcmp.lt.s32.totalorder %v607, %v639
    %vm642 = vcmp.lt.s32.totalorder %v608, %v639
    %vm643 = vcmp.lt.s32.totalorder %v609, %v639
    %vm644 = vcmp.lt.s32.totalorder %v610, %v639
    %vm645 = vcmp.lt.s32.totalorder %v611, %v639
    %vm646 = vcmp.lt.s32.totalorder %v612, %v639
    %vm647 = vcmp.lt.s32.totalorder %v613, %v639
    %vm648 = vcmp.lt.s32.totalorder %v614, %v639
    %vm649 = vcmp.lt.s32.totalorder %v615, %v639
    %vm650 = vcmp.lt.s32.totalorder %v616, %v639
    %vm651 = vcmp.lt.s32.totalorder %v617, %v639
    %vm652 = vcmp.lt.s32.totalorder %v618, %v639
    %vm653 = vcmp.lt.s32.totalorder %v619, %v639
    %vm654 = vcmp.lt.s32.totalorder %v620, %v639
    %vm655 = vcmp.lt.s32.totalorder %v621, %v639
    %vm656 = vmand %vm623, %vm640
    %vm657 = vmand %vm624, %vm641
    %vm658 = vmand %vm625, %vm642
    %vm659 = vmand %vm626, %vm643
    %vm660 = vmand %vm627, %vm644
    %vm661 = vmand %vm628, %vm645
    %vm662 = vmand %vm629, %vm646
    %vm663 = vmand %vm630, %vm647
    %vm664 = vmand %vm631, %vm648
    %vm665 = vmand %vm632, %vm649
    %vm666 = vmand %vm633, %vm650
    %vm667 = vmand %vm634, %vm651
    %vm668 = vmand %vm635, %vm652
    %vm669 = vmand %vm636, %vm653
    %vm670 = vmand %vm637, %vm654
    %vm671 = vmand %vm638, %vm655
    %v672 = vsel %vm656, 1, 0
    %v673 = vsel %vm657, 1, 0
    %v674 = vsel %vm658, 1, 0
    %v675 = vsel %vm659, 1, 0
    %v676 = vsel %vm660, 1, 0
    %v677 = vsel %vm661, 1, 0
    %v678 = vsel %vm662, 1, 0
    %v679 = vsel %vm663, 1, 0
    %v680 = vsel %vm664, 1, 0
    %v681 = vsel %vm665, 1, 0
    %v682 = vsel %vm666, 1, 0
    %v683 = vsel %vm667, 1, 0
    %v684 = vsel %vm668, 1, 0
    %v685 = vsel %vm669, 1, 0
    %v686 = vsel %vm670, 1, 0
    %v687 = vsel %vm671, 1, 0
    %v688 = vcvt.s32.f32 %v672
    %v689 = vcvt.s32.f32 %v673
    %v690 = vcvt.s32.f32 %v674
    %v691 = vcvt.s32.f32 %v675
    %v692 = vcvt.s32.f32 %v676
    %v693 = vcvt.s32.f32 %v677
    %v694 = vcvt.s32.f32 %v678
    %v695 = vcvt.s32.f32 %v679
    %v696 = vcvt.s32.f32 %v680
    %v697 = vcvt.s32.f32 %v681
    %v698 = vcvt.s32.f32 %v682
    %v699 = vcvt.s32.f32 %v683
    %v700 = vcvt.s32.f32 %v684
    %v701 = vcvt.s32.f32 %v685
    %v702 = vcvt.s32.f32 %v686
    %v703 = vcvt.s32.f32 %v687
    %v704 = vpack.c.bf16 %v689, %v688
    %v705 = vpack.c.bf16 %v691, %v690
    %v706 = vpack.c.bf16 %v693, %v692
    %v707 = vpack.c.bf16 %v695, %v694
    %v708 = vpack.c.bf16 %v697, %v696
    %v709 = vpack.c.bf16 %v699, %v698
    %v710 = vpack.c.bf16 %v701, %v700
    %v711 = vpack.c.bf16 %v703, %v702
    %v712 = vperm.slane %v522, 0
    %v713 = vperm.slane %v526, 0
    %v714 = vperm.slane %v530, 0
    %v715 = vperm.slane %v534, 0
    %v716 = vmul.f32 %v712, %v547
    %v717 = vmul.f32 %v712, %v549
    %v718 = vmul.f32 %v713, %v552
    %v719 = vmul.f32 %v713, %v554
    %v720 = vmul.f32 %v714, %v557
    %v721 = vmul.f32 %v714, %v559
    %v722 = vmul.f32 %v715, %v562
    %v723 = vmul.f32 %v715, %v564
    %v724 = vpack.c.bf16 %v716, %v716
    %v725 = vpack.c.bf16 %v717, %v717
    %v726 = vpack.c.bf16 %v718, %v718
    %v727 = vpack.c.bf16 %v719, %v719
    %v728 = vpack.c.bf16 %v720, %v720
    %v729 = vpack.c.bf16 %v721, %v721
    %v730 = vpack.c.bf16 %v722, %v722
    %v731 = vpack.c.bf16 %v723, %v723
    %v740 = vunpack.c.l.b16 %v724
    %v741 = vunpack.c.l.b16 %v725
    %v742 = vunpack.c.l.b16 %v726
    %v743 = vunpack.c.l.b16 %v727
    %v744 = vunpack.c.l.b16 %v728
    %v745 = vunpack.c.l.b16 %v729
    %v746 = vunpack.c.l.b16 %v730
    %v747 = vunpack.c.l.b16 %v731
    %v748 = vpack.c.b16 %v741, %v740
    %v749 = vpack.c.b16 %v743, %v742
    %v750 = vpack.c.b16 %v745, %v744
    %v751 = vpack.c.b16 %v747, %v746
    %756 = vmatpush.bf16.msra.mxu0 %v711
    %757 = vmatpush.bf16.msra.mxu0 %v710
    %758 = vmatpush.bf16.msra.mxu0 %v709
    %759 = vmatpush.bf16.msra.mxu0 %v708
    %760 = vmatpush.bf16.msra.mxu0 %v707
    %761 = vmatpush.bf16.msra.mxu0 %v706
    %762 = vmatpush.bf16.msra.mxu0 %v705
    %763 = vmatpush.bf16.msra.mxu0 %v704
    %764 = vmatmul.bf16.gmra.mxu0 %v748
    %v765 = vpop.f32.mrf.mxu0
    %v766 = vadd.f32 0.0, %v765
    %v767 = vpop.f32.mrf.mxu0
    %v768 = vadd.f32 0.0, %v767
    %769 = vmatmul.bf16.gmra.mxu0 %v749
    %v770 = vpop.f32.mrf.mxu0
    %v771 = vadd.f32 0.0, %v770
    %v772 = vpop.f32.mrf.mxu0
    %v773 = vadd.f32 0.0, %v772
    %774 = vmatmul.bf16.gmra.mxu0 %v750
    %v775 = vpop.f32.mrf.mxu0
    %v776 = vadd.f32 0.0, %v775
    %v777 = vpop.f32.mrf.mxu0
    %v778 = vadd.f32 0.0, %v777
    %779 = vmatmul.bf16.gmra.mxu0 %v751
    %v780 = vpop.f32.mrf.mxu0
    %v781 = vadd.f32 0.0, %v780
    %v782 = vpop.f32.mrf.mxu0
    %v783 = vadd.f32 0.0, %v782
    %784 = vdwg.mxu0
    %vm785 = vcmask 64512
    %v786 = vsel %vm785, %v766, -inf
    %v787 = vsel %vm785, %v768, -inf
    %v788 = vmax.f32 %v786, %v787
    %v789 = vrot.slane %v788, 4
    %v790 = vmax.f32 %v788, %v789
    %v791 = vrot.slane %v790, 2
    %v792 = vmax.f32 %v790, %v791
    %v793 = vrot.slane %v792, 1
    %v794 = vmax.f32 %v792, %v793
    %v795 = vsel %vm785, %v771, -inf
    %v796 = vsel %vm785, %v773, -inf
    %v797 = vmax.f32 %v795, %v796
    %v798 = vrot.slane %v797, 4
    %v799 = vmax.f32 %v797, %v798
    %v800 = vrot.slane %v799, 2
    %v801 = vmax.f32 %v799, %v800
    %v802 = vrot.slane %v801, 1
    %v803 = vmax.f32 %v801, %v802
    %v804 = vsel %vm785, %v776, -inf
    %v805 = vsel %vm785, %v778, -inf
    %v806 = vmax.f32 %v804, %v805
    %v807 = vrot.slane %v806, 4
    %v808 = vmax.f32 %v806, %v807
    %v809 = vrot.slane %v808, 2
    %v810 = vmax.f32 %v808, %v809
    %v811 = vrot.slane %v810, 1
    %v812 = vmax.f32 %v810, %v811
    %v813 = vsel %vm785, %v781, -inf
    %v814 = vsel %vm785, %v783, -inf
    %v815 = vmax.f32 %v813, %v814
    %v816 = vrot.slane %v815, 4
    %v817 = vmax.f32 %v815, %v816
    %v818 = vrot.slane %v817, 2
    %v819 = vmax.f32 %v817, %v818
    %v820 = vrot.slane %v819, 1
    %v821 = vmax.f32 %v819, %v820
    %v822 = vsub.f32 %v766, %v794
    %v823 = vsub.f32 %v768, %v794
    %v824 = vsub.f32 %v771, %v803
    %v825 = vsub.f32 %v773, %v803
    %v826 = vsub.f32 %v776, %v812
    %v827 = vsub.f32 %v778, %v812
    %v828 = vsub.f32 %v781, %v821
    %v829 = vsub.f32 %v783, %v821
    %v830 = vmul.f32 %v822, 1.442695
    %v831 = vpow.pop %v830
    %v832 = vmul.f32 %v823, 1.442695
    %v833 = vpow.pop %v832
    %v834 = vmul.f32 %v824, 1.442695
    %v835 = vpow.pop %v834
    %v836 = vmul.f32 %v825, 1.442695
    %v837 = vpow.pop %v836
    %v838 = vmul.f32 %v826, 1.442695
    %v839 = vpow.pop %v838
    %v840 = vmul.f32 %v827, 1.442695
    %v841 = vpow.pop %v840
    %v842 = vmul.f32 %v828, 1.442695
    %v843 = vpow.pop %v842
    %v844 = vmul.f32 %v829, 1.442695
    %v845 = vpow.pop %v844
    %v846 = vsel %vm785, %v831, 0.0
    %v847 = vsel %vm785, %v833, 0.0
    %v848 = vadd.f32 %v846, %v847
    %v849 = vrot.slane %v848, 4
    %v850 = vadd.f32 %v848, %v849
    %v851 = vrot.slane %v850, 2
    %v852 = vadd.f32 %v850, %v851
    %v853 = vrot.slane %v852, 1
    %v854 = vadd.f32 %v852, %v853
    %v855 = vsel %vm785, %v835, 0.0
    %v856 = vsel %vm785, %v837, 0.0
    %v857 = vadd.f32 %v855, %v856
    %v858 = vrot.slane %v857, 4
    %v859 = vadd.f32 %v857, %v858
    %v860 = vrot.slane %v859, 2
    %v861 = vadd.f32 %v859, %v860
    %v862 = vrot.slane %v861, 1
    %v863 = vadd.f32 %v861, %v862
    %v864 = vsel %vm785, %v839, 0.0
    %v865 = vsel %vm785, %v841, 0.0
    %v866 = vadd.f32 %v864, %v865
    %v867 = vrot.slane %v866, 4
    %v868 = vadd.f32 %v866, %v867
    %v869 = vrot.slane %v868, 2
    %v870 = vadd.f32 %v868, %v869
    %v871 = vrot.slane %v870, 1
    %v872 = vadd.f32 %v870, %v871
    %v873 = vsel %vm785, %v843, 0.0
    %v874 = vsel %vm785, %v845, 0.0
    %v875 = vadd.f32 %v873, %v874
    %v876 = vrot.slane %v875, 4
    %v877 = vadd.f32 %v875, %v876
    %v878 = vrot.slane %v877, 2
    %v879 = vadd.f32 %v877, %v878
    %v880 = vrot.slane %v879, 1
    %v881 = vadd.f32 %v879, %v880
    %v882 = vrcp.pop %v854
    %v883 = vrcp.pop %v863
    %v884 = vrcp.pop %v872
    %v885 = vrcp.pop %v881
    %v886 = vmul.f32 %v831, %v882
    %v887 = vmul.f32 %v833, %v882
    %v888 = vmul.f32 %v835, %v883
    %v889 = vmul.f32 %v837, %v883
    %v890 = vmul.f32 %v839, %v884
    %v891 = vmul.f32 %v841, %v884
    %v892 = vmul.f32 %v843, %v885
    %v893 = vmul.f32 %v845, %v885
    %v894 = vpack.c.bf16 %v886, %v886
    %v895 = vpack.c.bf16 %v887, %v887
    %v896 = vpack.c.bf16 %v888, %v888
    %v897 = vpack.c.bf16 %v889, %v889
    %v898 = vpack.c.bf16 %v890, %v890
    %v899 = vpack.c.bf16 %v891, %v891
    %v900 = vpack.c.bf16 %v892, %v892
    %v901 = vpack.c.bf16 %v893, %v893
    %v910 = vunpack.c.l.b16 %v894
    %v911 = vunpack.c.l.b16 %v895
    %v912 = vunpack.c.l.b16 %v896
    %v913 = vunpack.c.l.b16 %v897
    %v914 = vunpack.c.l.b16 %v898
    %v915 = vunpack.c.l.b16 %v899
    %v916 = vunpack.c.l.b16 %v900
    %v917 = vunpack.c.l.b16 %v901
    %v918 = vpack.c.b16 %v911, %v910
    %v919 = vpack.c.b16 %v913, %v912
    %v920 = vpack.c.b16 %v915, %v914
    %v921 = vpack.c.b16 %v917, %v916
    %v923 = vsel %vm785, %v918, 0
    %v926 = vsel %vm785, %v919, 0
    %v929 = vsel %vm785, %v920, 0
    %v932 = vsel %vm785, %v921, 0
    %vm934 = vcmask 1043456
    %v936 = vsel %vm934, %v606, 0
    %938 = vmatpush.bf16.msra.mxu0 0
    %939 = vmatpush.bf16.msra.mxu0 0
    %940 = vmatpush.bf16.msra.mxu0 0
    %941 = vmatpush.bf16.msra.mxu0 0
    %942 = vmatpush.bf16.msra.mxu0 0
    %943 = vmatpush.bf16.msra.mxu0 0
    %944 = vmatpush.bf16.msra.mxu0 0
    %945 = vmatpush.bf16.msra.mxu0 %v936
    %946 = vmatmul.bf16.gmra.mxu0 %v923
    %v947 = vpop.f32.mrf.mxu0
    %v948 = vadd.f32 0.0, %v947
    %v949 = vpop.f32.mrf.mxu0
    %v950 = vadd.f32 0.0, %v949
    %951 = vmatmul.bf16.gmra.mxu0 %v926
    %v952 = vpop.f32.mrf.mxu0
    %v953 = vadd.f32 0.0, %v952
    %v954 = vpop.f32.mrf.mxu0
    %v955 = vadd.f32 0.0, %v954
    %956 = vmatmul.bf16.gmra.mxu0 %v929
    %v957 = vpop.f32.mrf.mxu0
    %v958 = vadd.f32 0.0, %v957
    %v959 = vpop.f32.mrf.mxu0
    %v960 = vadd.f32 0.0, %v959
    %961 = vmatmul.bf16.gmra.mxu0 %v932
    %v962 = vpop.f32.mrf.mxu0
    %v963 = vadd.f32 0.0, %v962
    %v964 = vpop.f32.mrf.mxu0
    %v965 = vadd.f32 0.0, %v964
    %966 = vdwg.mxu0
    %v967 = vmul.f32 %v948, %v576
    %v968 = vmul.f32 %v950, %v578
    %v969 = vmul.f32 %v953, %v581
    %v970 = vmul.f32 %v955, %v583
    %v971 = vmul.f32 %v958, %v586
    %v972 = vmul.f32 %v960, %v588
    %v973 = vmul.f32 %v963, %v591
    %v974 = vmul.f32 %v965, %v593
    %v975 = vadd.f32 %v967, %v968
    %v976 = vrot.slane %v975, 4
    %v977 = vadd.f32 %v975, %v976
    %v978 = vrot.slane %v977, 2
    %v979 = vadd.f32 %v977, %v978
    %v980 = vrot.slane %v979, 1
    %v981 = vadd.f32 %v979, %v980
    %v982 = vadd.f32 %v969, %v970
    %v983 = vrot.slane %v982, 4
    %v984 = vadd.f32 %v982, %v983
    %v985 = vrot.slane %v984, 2
    %v986 = vadd.f32 %v984, %v985
    %v987 = vrot.slane %v986, 1
    %v988 = vadd.f32 %v986, %v987
    %v989 = vadd.f32 %v971, %v972
    %v990 = vrot.slane %v989, 4
    %v991 = vadd.f32 %v989, %v990
    %v992 = vrot.slane %v991, 2
    %v993 = vadd.f32 %v991, %v992
    %v994 = vrot.slane %v993, 1
    %v995 = vadd.f32 %v993, %v994
    %v996 = vadd.f32 %v973, %v974
    %v997 = vrot.slane %v996, 4
    %v998 = vadd.f32 %v996, %v997
    %v999 = vrot.slane %v998, 2
    %v1000 = vadd.f32 %v998, %v999
    %v1001 = vrot.slane %v1000, 1
    %v1002 = vadd.f32 %v1000, %v1001
    %v1003 = vpack.c.bf16 %v981, %v981
    %v1004 = vpack.c.bf16 %v988, %v988
    %v1005 = vpack.c.bf16 %v995, %v995
    %v1006 = vpack.c.bf16 %v1002, %v1002
    %v1007 = vld [vmem:[#allocation7] sm:$0xf]
    %v1008 = vld [vmem:[#allocation7 + $0x4] sm:$0xf]
    %v1009 = vld [vmem:[#allocation7 + $0x8] sm:$0xf]
    %v1010 = vld [vmem:[#allocation7 + $0xc] sm:$0xf]
    %v1011 = vld [vmem:[#allocation7 + $0x10] sm:$0xf]
    %v1012 = vld [vmem:[#allocation7 + $0x14] sm:$0xf]
    %v1013 = vld [vmem:[#allocation7 + $0x18] sm:$0xf]
    %v1014 = vld [vmem:[#allocation7 + $0x1c] sm:$0xf]
    %v1015 = vld [vmem:[#allocation7 + $0x20] sm:$0xf]
    %v1016 = vld [vmem:[#allocation7 + $0x24] sm:$0xf]
    %v1017 = vld [vmem:[#allocation7 + $0x28] sm:$0xf]
    %v1018 = vld [vmem:[#allocation7 + $0x2c] sm:$0xf]
    %v1019 = vld [vmem:[#allocation7 + $0x30] sm:$0xf]
    %v1020 = vld [vmem:[#allocation7 + $0x34] sm:$0xf]
    %v1021 = vld [vmem:[#allocation7 + $0x38] sm:$0xf]
    %v1022 = vld [vmem:[#allocation7 + $0x3c] sm:$0xf]
    %v1023 = vperm.slane %v130, 0
    %v1028 = vunpack.c.l.b16 %v1003
    %v1029 = vunpack.c.l.b16 %v1004
    %v1030 = vunpack.c.l.b16 %v1005
    %v1031 = vunpack.c.l.b16 %v1006
    %vm1032 = vcmask 1041409
    %v1033 = vsel %vm1032, %v1029, %v1028
    %vm1034 = vcmask 1042434
    %v1035 = vsel %vm1034, %v1030, %v1033
    %vm1036 = vcmask 1043459
    %v1037 = vsel %vm1036, %v1031, %v1035
    %v1038 = vpack.c.b16 %v1037, %v1037
    %v1056 = vunpack.c.l.b16 %v1007
    %v1057 = vunpack.c.l.b16 %v1008
    %v1058 = vunpack.c.l.b16 %v1009
    %v1059 = vunpack.c.l.b16 %v1010
    %v1060 = vunpack.c.l.b16 %v1011
    %v1061 = vunpack.c.l.b16 %v1012
    %v1062 = vunpack.c.l.b16 %v1013
    %v1063 = vunpack.c.l.b16 %v1014
    %v1064 = vunpack.c.l.b16 %v1015
    %v1065 = vunpack.c.l.b16 %v1016
    %v1066 = vunpack.c.l.b16 %v1017
    %v1067 = vunpack.c.l.b16 %v1018
    %v1068 = vunpack.c.l.b16 %v1019
    %v1069 = vunpack.c.l.b16 %v1020
    %v1070 = vunpack.c.l.b16 %v1021
    %v1071 = vunpack.c.l.b16 %v1022
    %v1072 = vpack.c.b16 %v1057, %v1056
    %v1073 = vpack.c.b16 %v1059, %v1058
    %v1074 = vpack.c.b16 %v1061, %v1060
    %v1075 = vpack.c.b16 %v1063, %v1062
    %v1076 = vpack.c.b16 %v1065, %v1064
    %v1077 = vpack.c.b16 %v1067, %v1066
    %v1078 = vpack.c.b16 %v1069, %v1068
    %v1079 = vpack.c.b16 %v1071, %v1070
    %1088 = vmatpush.bf16.msra.mxu0 %v1079
    %1089 = vmatpush.bf16.msra.mxu0 %v1078
    %1090 = vmatpush.bf16.msra.mxu0 %v1077
    %1091 = vmatpush.bf16.msra.mxu0 %v1076
    %1092 = vmatpush.bf16.msra.mxu0 %v1075
    %1093 = vmatpush.bf16.msra.mxu0 %v1074
    %1094 = vmatpush.bf16.msra.mxu0 %v1073
    %1095 = vmatpush.bf16.msra.mxu0 %v1072
    %1096 = vmatmul.bf16.gmra.mxu0 %v1038
    %v1097 = vpop.f32.mrf.mxu0
    %v1098 = vadd.f32 %v1023, %v1097
    %v1099 = vpop.f32.mrf.mxu0
    %1100 = vdwg.mxu0
    %v1102 = vrot.slane %v1098, 1
    %v1103 = vrot.slane %v1098, 2
    %v1104 = vrot.slane %v1098, 3
    %v1105 = vperm.slane %v1098, 0
    %v1106 = vperm.slane %v1102, 0
    %v1107 = vperm.slane %v1103, 0
    %v1108 = vperm.slane %v1104, 0
    %v1113 = vadd.f32 %v120, %v1105
    %v1114 = vadd.f32 %v121, %v1105
    %v1115 = vadd.f32 %v122, %v1106
    %v1116 = vadd.f32 %v123, %v1106
    %v1117 = vadd.f32 %v124, %v1107
    %v1118 = vadd.f32 %v125, %v1107
    %v1119 = vadd.f32 %v126, %v1108
    %v1120 = vadd.f32 %v127, %v1108
    %1121 = vadd.xlane.f32.xlu0 %v1113
    %v1122 = vpop.xlane.xlu0 %1121
    %1123 = vadd.xlane.f32.xlu0 %v1114
    %v1124 = vpop.xlane.xlu0 %1123
    %1125 = vadd.xlane.f32.xlu0 %v1115
    %v1126 = vpop.xlane.xlu0 %1125
    %1127 = vadd.xlane.f32.xlu0 %v1116
    %v1128 = vpop.xlane.xlu0 %1127
    %1129 = vadd.xlane.f32.xlu0 %v1117
    %v1130 = vpop.xlane.xlu0 %1129
    %1131 = vadd.xlane.f32.xlu0 %v1118
    %v1132 = vpop.xlane.xlu0 %1131
    %1133 = vadd.xlane.f32.xlu0 %v1119
    %v1134 = vpop.xlane.xlu0 %1133
    %1135 = vadd.xlane.f32.xlu0 %v1120
    %v1136 = vpop.xlane.xlu0 %1135
    %v1137 = vmul.f32 %v1122, %v157
    %v1138 = vmul.f32 %v1124, %v157
    %v1139 = vmul.f32 %v1126, %v157
    %v1140 = vmul.f32 %v1128, %v157
    %v1141 = vmul.f32 %v1130, %v157
    %v1142 = vmul.f32 %v1132, %v157
    %v1143 = vmul.f32 %v1134, %v157
    %v1144 = vmul.f32 %v1136, %v157
    %v1145 = vsub.f32 %v1113, %v1137
    %v1146 = vsub.f32 %v1114, %v1138
    %v1147 = vsub.f32 %v1115, %v1139
    %v1148 = vsub.f32 %v1116, %v1140
    %v1149 = vsub.f32 %v1117, %v1141
    %v1150 = vsub.f32 %v1118, %v1142
    %v1151 = vsub.f32 %v1119, %v1143
    %v1152 = vsub.f32 %v1120, %v1144
    %v1153 = vmul.f32 %v1145, %v1145
    %v1154 = vmul.f32 %v1146, %v1146
    %v1155 = vmul.f32 %v1147, %v1147
    %v1156 = vmul.f32 %v1148, %v1148
    %v1157 = vmul.f32 %v1149, %v1149
    %v1158 = vmul.f32 %v1150, %v1150
    %v1159 = vmul.f32 %v1151, %v1151
    %v1160 = vmul.f32 %v1152, %v1152
    %1161 = vadd.xlane.f32.xlu0 %v1153
    %v1162 = vpop.xlane.xlu0 %1161
    %1163 = vadd.xlane.f32.xlu0 %v1154
    %v1164 = vpop.xlane.xlu0 %1163
    %1165 = vadd.xlane.f32.xlu0 %v1155
    %v1166 = vpop.xlane.xlu0 %1165
    %1167 = vadd.xlane.f32.xlu0 %v1156
    %v1168 = vpop.xlane.xlu0 %1167
    %1169 = vadd.xlane.f32.xlu0 %v1157
    %v1170 = vpop.xlane.xlu0 %1169
    %1171 = vadd.xlane.f32.xlu0 %v1158
    %v1172 = vpop.xlane.xlu0 %1171
    %1173 = vadd.xlane.f32.xlu0 %v1159
    %v1174 = vpop.xlane.xlu0 %1173
    %1175 = vadd.xlane.f32.xlu0 %v1160
    %v1176 = vpop.xlane.xlu0 %1175
    %v1177 = vmul.f32 %v1162, %v157
    %v1178 = vmul.f32 %v1164, %v157
    %v1179 = vmul.f32 %v1166, %v157
    %v1180 = vmul.f32 %v1168, %v157
    %v1181 = vmul.f32 %v1170, %v157
    %v1182 = vmul.f32 %v1172, %v157
    %v1183 = vmul.f32 %v1174, %v157
    %v1184 = vmul.f32 %v1176, %v157
    %v1185 = vadd.f32 %v1177, 1e-05
    %v1186 = vadd.f32 %v1178, 1e-05
    %v1187 = vadd.f32 %v1179, 1e-05
    %v1188 = vadd.f32 %v1180, 1e-05
    %v1189 = vadd.f32 %v1181, 1e-05
    %v1190 = vadd.f32 %v1182, 1e-05
    %v1191 = vadd.f32 %v1183, 1e-05
    %v1192 = vadd.f32 %v1184, 1e-05
    %v1193 = vrsqrt.pop %v1185
    %v1194 = vmul.f32 %v1193, %v1185
    %v1195 = vmul.f32 %v1194, %v1193
    %v1196 = vmul.f32 0.5, %v1195
    %v1197 = vsub.f32 1.5, %v1196
    %v1198 = vmul.f32 %v1193, %v1197
    %vm1199 = vweird.f32 %v1185
    %vm1200 = vweird.f32 %v1193
    %vm1201 = vmor %vm1199, %vm1200
    %v1202 = vsel %vm1201, %v1193, %v1198
    %v1203 = vrsqrt.pop %v1186
    %v1204 = vmul.f32 %v1203, %v1186
    %v1205 = vmul.f32 %v1204, %v1203
    %v1206 = vmul.f32 0.5, %v1205
    %v1207 = vsub.f32 1.5, %v1206
    %v1208 = vmul.f32 %v1203, %v1207
    %vm1209 = vweird.f32 %v1186
    %vm1210 = vweird.f32 %v1203
    %vm1211 = vmor %vm1209, %vm1210
    %v1212 = vsel %vm1211, %v1203, %v1208
    %v1213 = vrsqrt.pop %v1187
    %v1214 = vmul.f32 %v1213, %v1187
    %v1215 = vmul.f32 %v1214, %v1213
    %v1216 = vmul.f32 0.5, %v1215
    %v1217 = vsub.f32 1.5, %v1216
    %v1218 = vmul.f32 %v1213, %v1217
    %vm1219 = vweird.f32 %v1187
    %vm1220 = vweird.f32 %v1213
    %vm1221 = vmor %vm1219, %vm1220
    %v1222 = vsel %vm1221, %v1213, %v1218
    %v1223 = vrsqrt.pop %v1188
    %v1224 = vmul.f32 %v1223, %v1188
    %v1225 = vmul.f32 %v1224, %v1223
    %v1226 = vmul.f32 0.5, %v1225
    %v1227 = vsub.f32 1.5, %v1226
    %v1228 = vmul.f32 %v1223, %v1227
    %vm1229 = vweird.f32 %v1188
    %vm1230 = vweird.f32 %v1223
    %vm1231 = vmor %vm1229, %vm1230
    %v1232 = vsel %vm1231, %v1223, %v1228
    %v1233 = vrsqrt.pop %v1189
    %v1234 = vmul.f32 %v1233, %v1189
    %v1235 = vmul.f32 %v1234, %v1233
    %v1236 = vmul.f32 0.5, %v1235
    %v1237 = vsub.f32 1.5, %v1236
    %v1238 = vmul.f32 %v1233, %v1237
    %vm1239 = vweird.f32 %v1189
    %vm1240 = vweird.f32 %v1233
    %vm1241 = vmor %vm1239, %vm1240
    %v1242 = vsel %vm1241, %v1233, %v1238
    %v1243 = vrsqrt.pop %v1190
    %v1244 = vmul.f32 %v1243, %v1190
    %v1245 = vmul.f32 %v1244, %v1243
    %v1246 = vmul.f32 0.5, %v1245
    %v1247 = vsub.f32 1.5, %v1246
    %v1248 = vmul.f32 %v1243, %v1247
    %vm1249 = vweird.f32 %v1190
    %vm1250 = vweird.f32 %v1243
    %vm1251 = vmor %vm1249, %vm1250
    %v1252 = vsel %vm1251, %v1243, %v1248
    %v1253 = vrsqrt.pop %v1191
    %v1254 = vmul.f32 %v1253, %v1191
    %v1255 = vmul.f32 %v1254, %v1253
    %v1256 = vmul.f32 0.5, %v1255
    %v1257 = vsub.f32 1.5, %v1256
    %v1258 = vmul.f32 %v1253, %v1257
    %vm1259 = vweird.f32 %v1191
    %vm1260 = vweird.f32 %v1253
    %vm1261 = vmor %vm1259, %vm1260
    %v1262 = vsel %vm1261, %v1253, %v1258
    %v1263 = vrsqrt.pop %v1192
    %v1264 = vmul.f32 %v1263, %v1192
    %v1265 = vmul.f32 %v1264, %v1263
    %v1266 = vmul.f32 0.5, %v1265
    %v1267 = vsub.f32 1.5, %v1266
    %v1268 = vmul.f32 %v1263, %v1267
    %vm1269 = vweird.f32 %v1192
    %vm1270 = vweird.f32 %v1263
    %vm1271 = vmor %vm1269, %vm1270
    %v1272 = vsel %vm1271, %v1263, %v1268
    %v1273 = vmul.f32 %v1145, %v1202
    %v1274 = vmul.f32 %v1146, %v1212
    %v1275 = vmul.f32 %v1147, %v1222
    %v1276 = vmul.f32 %v1148, %v1232
    %v1277 = vmul.f32 %v1149, %v1242
    %v1278 = vmul.f32 %v1150, %v1252
    %v1279 = vmul.f32 %v1151, %v1262
    %v1280 = vmul.f32 %v1152, %v1272
    %v1281 = vperm.slane %v131, 0
    %v1282 = vmul.f32 %v1273, %v1281
    %v1283 = vmul.f32 %v1274, %v1281
    %v1284 = vmul.f32 %v1275, %v1281
    %v1285 = vmul.f32 %v1276, %v1281
    %v1286 = vmul.f32 %v1277, %v1281
    %v1287 = vmul.f32 %v1278, %v1281
    %v1288 = vmul.f32 %v1279, %v1281
    %v1289 = vmul.f32 %v1280, %v1281
    %v1290 = vperm.slane %v132, 0
    %v1291 = vadd.f32 %v1282, %v1290
    %v1292 = vadd.f32 %v1283, %v1290
    %v1293 = vadd.f32 %v1284, %v1290
    %v1294 = vadd.f32 %v1285, %v1290
    %v1295 = vadd.f32 %v1286, %v1290
    %v1296 = vadd.f32 %v1287, %v1290
    %v1297 = vadd.f32 %v1288, %v1290
    %v1298 = vadd.f32 %v1289, %v1290
    %v1299 = vpack.c.bf16 %v1291, %v1291
    %v1300 = vpack.c.bf16 %v1292, %v1292
    %v1301 = vpack.c.bf16 %v1293, %v1293
    %v1302 = vpack.c.bf16 %v1294, %v1294
    %v1303 = vpack.c.bf16 %v1295, %v1295
    %v1304 = vpack.c.bf16 %v1296, %v1296
    %v1305 = vpack.c.bf16 %v1297, %v1297
    %v1306 = vpack.c.bf16 %v1298, %v1298
    %v1307 = vld [vmem:[#allocation8] sm:$0xff]
    %v1308 = vld [vmem:[#allocation8 + $0x8] sm:$0xff]
    %v1309 = vld [vmem:[#allocation8 + $0x10] sm:$0xff]
    %v1310 = vld [vmem:[#allocation8 + $0x18] sm:$0xff]
    %v1311 = vld [vmem:[#allocation8 + $0x20] sm:$0xff]
    %v1312 = vld [vmem:[#allocation8 + $0x28] sm:$0xff]
    %v1313 = vld [vmem:[#allocation8 + $0x30] sm:$0xff]
    %v1314 = vld [vmem:[#allocation8 + $0x38] sm:$0xff]
    %v1315 = vld [vmem:[#allocation8 + $0x40] sm:$0xff]
    %v1316 = vld [vmem:[#allocation8 + $0x48] sm:$0xff]
    %v1317 = vld [vmem:[#allocation8 + $0x50] sm:$0xff]
    %v1318 = vld [vmem:[#allocation8 + $0x58] sm:$0xff]
    %v1319 = vld [vmem:[#allocation8 + $0x60] sm:$0xff]
    %v1320 = vld [vmem:[#allocation8 + $0x68] sm:$0xff]
    %v1321 = vld [vmem:[#allocation8 + $0x70] sm:$0xff]
    %v1322 = vld [vmem:[#allocation8 + $0x78] sm:$0xff]
    %v1323 = vld [vmem:[#allocation8 + $0x80] sm:$0xff]
    %v1324 = vld [vmem:[#allocation8 + $0x88] sm:$0xff]
    %v1325 = vld [vmem:[#allocation8 + $0x90] sm:$0xff]
    %v1326 = vld [vmem:[#allocation8 + $0x98] sm:$0xff]
    %v1327 = vld [vmem:[#allocation8 + $0xa0] sm:$0xff]
    %v1328 = vld [vmem:[#allocation8 + $0xa8] sm:$0xff]
    %v1329 = vld [vmem:[#allocation8 + $0xb0] sm:$0xff]
    %v1330 = vld [vmem:[#allocation8 + $0xb8] sm:$0xff]
    %v1331 = vld [vmem:[#allocation8 + $0xc0] sm:$0xff]
    %v1332 = vld [vmem:[#allocation8 + $0xc8] sm:$0xff]
    %v1333 = vld [vmem:[#allocation8 + $0xd0] sm:$0xff]
    %v1334 = vld [vmem:[#allocation8 + $0xd8] sm:$0xff]
    %v1335 = vld [vmem:[#allocation8 + $0xe0] sm:$0xff]
    %v1336 = vld [vmem:[#allocation8 + $0xe8] sm:$0xff]
    %v1337 = vld [vmem:[#allocation8 + $0xf0] sm:$0xff]
    %v1338 = vld [vmem:[#allocation8 + $0xf8] sm:$0xff]
    %v1340 = vperm.slane %v134, 0
    %v1341 = vperm.slane %v134, 1
    %v1342 = vperm.slane %v134, 2
    %v1343 = vperm.slane %v134, 3
    %v1356 = vunpack.c.l.b16 %v1299
    %v1357 = vunpack.c.l.b16 %v1300
    %v1358 = vunpack.c.l.b16 %v1301
    %v1359 = vunpack.c.l.b16 %v1302
    %v1360 = vunpack.c.l.b16 %v1303
    %v1361 = vunpack.c.l.b16 %v1304
    %v1362 = vunpack.c.l.b16 %v1305
    %v1363 = vunpack.c.l.b16 %v1306
    %v1364 = vpack.c.b16 %v1357, %v1356
    %v1365 = vpack.c.b16 %v1359, %v1358
    %v1366 = vpack.c.b16 %v1361, %v1360
    %v1367 = vpack.c.b16 %v1363, %v1362
    %v1404 = vunpack.c.l.b16 %v1307
    %v1405 = vunpack.c.h.b16 %v1307
    %v1406 = vunpack.c.l.b16 %v1308
    %v1407 = vunpack.c.h.b16 %v1308
    %v1408 = vunpack.c.l.b16 %v1309
    %v1409 = vunpack.c.h.b16 %v1309
    %v1410 = vunpack.c.l.b16 %v1310
    %v1411 = vunpack.c.h.b16 %v1310
    %v1412 = vunpack.c.l.b16 %v1311
    %v1413 = vunpack.c.h.b16 %v1311
    %v1414 = vunpack.c.l.b16 %v1312
    %v1415 = vunpack.c.h.b16 %v1312
    %v1416 = vunpack.c.l.b16 %v1313
    %v1417 = vunpack.c.h.b16 %v1313
    %v1418 = vunpack.c.l.b16 %v1314
    %v1419 = vunpack.c.h.b16 %v1314
    %v1420 = vunpack.c.l.b16 %v1315
    %v1421 = vunpack.c.h.b16 %v1315
    %v1422 = vunpack.c.l.b16 %v1316
    %v1423 = vunpack.c.h.b16 %v1316
    %v1424 = vunpack.c.l.b16 %v1317
    %v1425 = vunpack.c.h.b16 %v1317
    %v1426 = vunpack.c.l.b16 %v1318
    %v1427 = vunpack.c.h.b16 %v1318
    %v1428 = vunpack.c.l.b16 %v1319
    %v1429 = vunpack.c.h.b16 %v1319
    %v1430 = vunpack.c.l.b16 %v1320
    %v1431 = vunpack.c.h.b16 %v1320
    %v1432 = vunpack.c.l.b16 %v1321
    %v1433 = vunpack.c.h.b16 %v1321
    %v1434 = vunpack.c.l.b16 %v1322
    %v1435 = vunpack.c.h.b16 %v1322
    %v1436 = vunpack.c.l.b16 %v1323
    %v1437 = vunpack.c.h.b16 %v1323
    %v1438 = vunpack.c.l.b16 %v1324
    %v1439 = vunpack.c.h.b16 %v1324
    %v1440 = vunpack.c.l.b16 %v1325
    %v1441 = vunpack.c.h.b16 %v1325
    %v1442 = vunpack.c.l.b16 %v1326
    %v1443 = vunpack.c.h.b16 %v1326
    %v1444 = vunpack.c.l.b16 %v1327
    %v1445 = vunpack.c.h.b16 %v1327
    %v1446 = vunpack.c.l.b16 %v1328
    %v1447 = vunpack.c.h.b16 %v1328
    %v1448 = vunpack.c.l.b16 %v1329
    %v1449 = vunpack.c.h.b16 %v1329
    %v1450 = vunpack.c.l.b16 %v1330
    %v1451 = vunpack.c.h.b16 %v1330
    %v1452 = vunpack.c.l.b16 %v1331
    %v1453 = vunpack.c.h.b16 %v1331
    %v1454 = vunpack.c.l.b16 %v1332
    %v1455 = vunpack.c.h.b16 %v1332
    %v1456 = vunpack.c.l.b16 %v1333
    %v1457 = vunpack.c.h.b16 %v1333
    %v1458 = vunpack.c.l.b16 %v1334
    %v1459 = vunpack.c.h.b16 %v1334
    %v1460 = vunpack.c.l.b16 %v1335
    %v1461 = vunpack.c.h.b16 %v1335
    %v1462 = vunpack.c.l.b16 %v1336
    %v1463 = vunpack.c.h.b16 %v1336
    %v1464 = vunpack.c.l.b16 %v1337
    %v1465 = vunpack.c.h.b16 %v1337
    %v1466 = vunpack.c.l.b16 %v1338
    %v1467 = vunpack.c.h.b16 %v1338
    %v1468 = vpack.c.b16 %v1408, %v1404
    %v1469 = vpack.c.b16 %v1409, %v1405
    %v1470 = vpack.c.b16 %v1410, %v1406
    %v1471 = vpack.c.b16 %v1411, %v1407
    %v1472 = vpack.c.b16 %v1416, %v1412
    %v1473 = vpack.c.b16 %v1417, %v1413
    %v1474 = vpack.c.b16 %v1418, %v1414
    %v1475 = vpack.c.b16 %v1419, %v1415
    %v1476 = vpack.c.b16 %v1424, %v1420
    %v1477 = vpack.c.b16 %v1425, %v1421
    %v1478 = vpack.c.b16 %v1426, %v1422
    %v1479 = vpack.c.b16 %v1427, %v1423
    %v1480 = vpack.c.b16 %v1432, %v1428
    %v1481 = vpack.c.b16 %v1433, %v1429
    %v1482 = vpack.c.b16 %v1434, %v1430
    %v1483 = vpack.c.b16 %v1435, %v1431
    %v1484 = vpack.c.b16 %v1440, %v1436
    %v1485 = vpack.c.b16 %v1441, %v1437
    %v1486 = vpack.c.b16 %v1442, %v1438
    %v1487 = vpack.c.b16 %v1443, %v1439
    %v1488 = vpack.c.b16 %v1448, %v1444
    %v1489 = vpack.c.b16 %v1449, %v1445
    %v1490 = vpack.c.b16 %v1450, %v1446
    %v1491 = vpack.c.b16 %v1451, %v1447
    %v1492 = vpack.c.b16 %v1456, %v1452
    %v1493 = vpack.c.b16 %v1457, %v1453
    %v1494 = vpack.c.b16 %v1458, %v1454
    %v1495 = vpack.c.b16 %v1459, %v1455
    %v1496 = vpack.c.b16 %v1464, %v1460
    %v1497 = vpack.c.b16 %v1465, %v1461
    %v1498 = vpack.c.b16 %v1466, %v1462
    %v1499 = vpack.c.b16 %v1467, %v1463
    %1532 = vmatpush.bf16.msra.mxu0 %v1496
    %1533 = vmatpush.bf16.msra.mxu0 %v1492
    %1534 = vmatpush.bf16.msra.mxu0 %v1488
    %1535 = vmatpush.bf16.msra.mxu0 %v1484
    %1536 = vmatpush.bf16.msra.mxu0 %v1480
    %1537 = vmatpush.bf16.msra.mxu0 %v1476
    %1538 = vmatpush.bf16.msra.mxu0 %v1472
    %1539 = vmatpush.bf16.msra.mxu0 %v1468
    %1540 = vmatmul.bf16.gmra.mxu0 %v1364
    %v1541 = vpop.f32.mrf.mxu0
    %v1542 = vadd.f32 %v1340, %v1541
    %v1543 = vpop.f32.mrf.mxu0
    %v1544 = vadd.f32 %v1340, %v1543
    %1545 = vmatmul.bf16.gmra.mxu0 %v1365
    %v1546 = vpop.f32.mrf.mxu0
    %v1547 = vadd.f32 %v1340, %v1546
    %v1548 = vpop.f32.mrf.mxu0
    %v1549 = vadd.f32 %v1340, %v1548
    %1550 = vmatmul.bf16.gmra.mxu0 %v1366
    %v1551 = vpop.f32.mrf.mxu0
    %v1552 = vadd.f32 %v1340, %v1551
    %v1553 = vpop.f32.mrf.mxu0
    %v1554 = vadd.f32 %v1340, %v1553
    %1555 = vmatmul.bf16.gmra.mxu0 %v1367
    %v1556 = vpop.f32.mrf.mxu0
    %v1557 = vadd.f32 %v1340, %v1556
    %v1558 = vpop.f32.mrf.mxu0
    %v1559 = vadd.f32 %v1340, %v1558
    %1560 = vdwg.mxu0
    %1561 = vmatpush.bf16.msra.mxu0 %v1497
    %1562 = vmatpush.bf16.msra.mxu0 %v1493
    %1563 = vmatpush.bf16.msra.mxu0 %v1489
    %1564 = vmatpush.bf16.msra.mxu0 %v1485
    %1565 = vmatpush.bf16.msra.mxu0 %v1481
    %1566 = vmatpush.bf16.msra.mxu0 %v1477
    %1567 = vmatpush.bf16.msra.mxu0 %v1473
    %1568 = vmatpush.bf16.msra.mxu0 %v1469
    %1569 = vmatmul.bf16.gmra.mxu0 %v1364
    %v1570 = vpop.f32.mrf.mxu0
    %v1571 = vadd.f32 %v1341, %v1570
    %v1572 = vpop.f32.mrf.mxu0
    %v1573 = vadd.f32 %v1341, %v1572
    %1574 = vmatmul.bf16.gmra.mxu0 %v1365
    %v1575 = vpop.f32.mrf.mxu0
    %v1576 = vadd.f32 %v1341, %v1575
    %v1577 = vpop.f32.mrf.mxu0
    %v1578 = vadd.f32 %v1341, %v1577
    %1579 = vmatmul.bf16.gmra.mxu0 %v1366
    %v1580 = vpop.f32.mrf.mxu0
    %v1581 = vadd.f32 %v1341, %v1580
    %v1582 = vpop.f32.mrf.mxu0
    %v1583 = vadd.f32 %v1341, %v1582
    %1584 = vmatmul.bf16.gmra.mxu0 %v1367
    %v1585 = vpop.f32.mrf.mxu0
    %v1586 = vadd.f32 %v1341, %v1585
    %v1587 = vpop.f32.mrf.mxu0
    %v1588 = vadd.f32 %v1341, %v1587
    %1589 = vdwg.mxu0
    %1590 = vmatpush.bf16.msra.mxu0 %v1498
    %1591 = vmatpush.bf16.msra.mxu0 %v1494
    %1592 = vmatpush.bf16.msra.mxu0 %v1490
    %1593 = vmatpush.bf16.msra.mxu0 %v1486
    %1594 = vmatpush.bf16.msra.mxu0 %v1482
    %1595 = vmatpush.bf16.msra.mxu0 %v1478
    %1596 = vmatpush.bf16.msra.mxu0 %v1474
    %1597 = vmatpush.bf16.msra.mxu0 %v1470
    %1598 = vmatmul.bf16.gmra.mxu0 %v1364
    %v1599 = vpop.f32.mrf.mxu0
    %v1600 = vadd.f32 %v1342, %v1599
    %v1601 = vpop.f32.mrf.mxu0
    %v1602 = vadd.f32 %v1342, %v1601
    %1603 = vmatmul.bf16.gmra.mxu0 %v1365
    %v1604 = vpop.f32.mrf.mxu0
    %v1605 = vadd.f32 %v1342, %v1604
    %v1606 = vpop.f32.mrf.mxu0
    %v1607 = vadd.f32 %v1342, %v1606
    %1608 = vmatmul.bf16.gmra.mxu0 %v1366
    %v1609 = vpop.f32.mrf.mxu0
    %v1610 = vadd.f32 %v1342, %v1609
    %v1611 = vpop.f32.mrf.mxu0
    %v1612 = vadd.f32 %v1342, %v1611
    %1613 = vmatmul.bf16.gmra.mxu0 %v1367
    %v1614 = vpop.f32.mrf.mxu0
    %v1615 = vadd.f32 %v1342, %v1614
    %v1616 = vpop.f32.mrf.mxu0
    %v1617 = vadd.f32 %v1342, %v1616
    %1618 = vdwg.mxu0
    %1619 = vmatpush.bf16.msra.mxu0 %v1499
    %1620 = vmatpush.bf16.msra.mxu0 %v1495
    %1621 = vmatpush.bf16.msra.mxu0 %v1491
    %1622 = vmatpush.bf16.msra.mxu0 %v1487
    %1623 = vmatpush.bf16.msra.mxu0 %v1483
    %1624 = vmatpush.bf16.msra.mxu0 %v1479
    %1625 = vmatpush.bf16.msra.mxu0 %v1475
    %1626 = vmatpush.bf16.msra.mxu0 %v1471
    %1627 = vmatmul.bf16.gmra.mxu0 %v1364
    %v1628 = vpop.f32.mrf.mxu0
    %v1629 = vadd.f32 %v1343, %v1628
    %v1630 = vpop.f32.mrf.mxu0
    %v1631 = vadd.f32 %v1343, %v1630
    %1632 = vmatmul.bf16.gmra.mxu0 %v1365
    %v1633 = vpop.f32.mrf.mxu0
    %v1634 = vadd.f32 %v1343, %v1633
    %v1635 = vpop.f32.mrf.mxu0
    %v1636 = vadd.f32 %v1343, %v1635
    %1637 = vmatmul.bf16.gmra.mxu0 %v1366
    %v1638 = vpop.f32.mrf.mxu0
    %v1639 = vadd.f32 %v1343, %v1638
    %v1640 = vpop.f32.mrf.mxu0
    %v1641 = vadd.f32 %v1343, %v1640
    %1642 = vmatmul.bf16.gmra.mxu0 %v1367
    %v1643 = vpop.f32.mrf.mxu0
    %v1644 = vadd.f32 %v1343, %v1643
    %v1645 = vpop.f32.mrf.mxu0
    %v1646 = vadd.f32 %v1343, %v1645
    %1647 = vdwg.mxu0
    %v1648 = vmul.f32 %v1542, %v1542
    %v1649 = vmul.f32 %v1571, %v1571
    %v1650 = vmul.f32 %v1600, %v1600
    %v1651 = vmul.f32 %v1629, %v1629
    %v1652 = vmul.f32 %v1544, %v1544
    %v1653 = vmul.f32 %v1573, %v1573
    %v1654 = vmul.f32 %v1602, %v1602
    %v1655 = vmul.f32 %v1631, %v1631
    %v1656 = vmul.f32 %v1547, %v1547
    %v1657 = vmul.f32 %v1576, %v1576
    %v1658 = vmul.f32 %v1605, %v1605
    %v1659 = vmul.f32 %v1634, %v1634
    %v1660 = vmul.f32 %v1549, %v1549
    %v1661 = vmul.f32 %v1578, %v1578
    %v1662 = vmul.f32 %v1607, %v1607
    %v1663 = vmul.f32 %v1636, %v1636
    %v1664 = vmul.f32 %v1552, %v1552
    %v1665 = vmul.f32 %v1581, %v1581
    %v1666 = vmul.f32 %v1610, %v1610
    %v1667 = vmul.f32 %v1639, %v1639
    %v1668 = vmul.f32 %v1554, %v1554
    %v1669 = vmul.f32 %v1583, %v1583
    %v1670 = vmul.f32 %v1612, %v1612
    %v1671 = vmul.f32 %v1641, %v1641
    %v1672 = vmul.f32 %v1557, %v1557
    %v1673 = vmul.f32 %v1586, %v1586
    %v1674 = vmul.f32 %v1615, %v1615
    %v1675 = vmul.f32 %v1644, %v1644
    %v1676 = vmul.f32 %v1559, %v1559
    %v1677 = vmul.f32 %v1588, %v1588
    %v1678 = vmul.f32 %v1617, %v1617
    %v1679 = vmul.f32 %v1646, %v1646
    %v1680 = vmul.f32 %v1648, %v1542
    %v1681 = vmul.f32 %v1649, %v1571
    %v1682 = vmul.f32 %v1650, %v1600
    %v1683 = vmul.f32 %v1651, %v1629
    %v1684 = vmul.f32 %v1652, %v1544
    %v1685 = vmul.f32 %v1653, %v1573
    %v1686 = vmul.f32 %v1654, %v1602
    %v1687 = vmul.f32 %v1655, %v1631
    %v1688 = vmul.f32 %v1656, %v1547
    %v1689 = vmul.f32 %v1657, %v1576
    %v1690 = vmul.f32 %v1658, %v1605
    %v1691 = vmul.f32 %v1659, %v1634
    %v1692 = vmul.f32 %v1660, %v1549
    %v1693 = vmul.f32 %v1661, %v1578
    %v1694 = vmul.f32 %v1662, %v1607
    %v1695 = vmul.f32 %v1663, %v1636
    %v1696 = vmul.f32 %v1664, %v1552
    %v1697 = vmul.f32 %v1665, %v1581
    %v1698 = vmul.f32 %v1666, %v1610
    %v1699 = vmul.f32 %v1667, %v1639
    %v1700 = vmul.f32 %v1668, %v1554
    %v1701 = vmul.f32 %v1669, %v1583
    %v1702 = vmul.f32 %v1670, %v1612
    %v1703 = vmul.f32 %v1671, %v1641
    %v1704 = vmul.f32 %v1672, %v1557
    %v1705 = vmul.f32 %v1673, %v1586
    %v1706 = vmul.f32 %v1674, %v1615
    %v1707 = vmul.f32 %v1675, %v1644
    %v1708 = vmul.f32 %v1676, %v1559
    %v1709 = vmul.f32 %v1677, %v1588
    %v1710 = vmul.f32 %v1678, %v1617
    %v1711 = vmul.f32 %v1679, %v1646
    %v1712 = vmul.f32 %v1680, 0.044715
    %v1713 = vmul.f32 %v1681, 0.044715
    %v1714 = vmul.f32 %v1682, 0.044715
    %v1715 = vmul.f32 %v1683, 0.044715
    %v1716 = vmul.f32 %v1684, 0.044715
    %v1717 = vmul.f32 %v1685, 0.044715
    %v1718 = vmul.f32 %v1686, 0.044715
    %v1719 = vmul.f32 %v1687, 0.044715
    %v1720 = vmul.f32 %v1688, 0.044715
    %v1721 = vmul.f32 %v1689, 0.044715
    %v1722 = vmul.f32 %v1690, 0.044715
    %v1723 = vmul.f32 %v1691, 0.044715
    %v1724 = vmul.f32 %v1692, 0.044715
    %v1725 = vmul.f32 %v1693, 0.044715
    %v1726 = vmul.f32 %v1694, 0.044715
    %v1727 = vmul.f32 %v1695, 0.044715
    %v1728 = vmul.f32 %v1696, 0.044715
    %v1729 = vmul.f32 %v1697, 0.044715
    %v1730 = vmul.f32 %v1698, 0.044715
    %v1731 = vmul.f32 %v1699, 0.044715
    %v1732 = vmul.f32 %v1700, 0.044715
    %v1733 = vmul.f32 %v1701, 0.044715
    %v1734 = vmul.f32 %v1702, 0.044715
    %v1735 = vmul.f32 %v1703, 0.044715
    %v1736 = vmul.f32 %v1704, 0.044715
    %v1737 = vmul.f32 %v1705, 0.044715
    %v1738 = vmul.f32 %v1706, 0.044715
    %v1739 = vmul.f32 %v1707, 0.044715
    %v1740 = vmul.f32 %v1708, 0.044715
    %v1741 = vmul.f32 %v1709, 0.044715
    %v1742 = vmul.f32 %v1710, 0.044715
    %v1743 = vmul.f32 %v1711, 0.044715
    %v1744 = vadd.f32 %v1542, %v1712
    %v1745 = vadd.f32 %v1571, %v1713
    %v1746 = vadd.f32 %v1600, %v1714
    %v1747 = vadd.f32 %v1629, %v1715
    %v1748 = vadd.f32 %v1544, %v1716
    %v1749 = vadd.f32 %v1573, %v1717
    %v1750 = vadd.f32 %v1602, %v1718
    %v1751 = vadd.f32 %v1631, %v1719
    %v1752 = vadd.f32 %v1547, %v1720
    %v1753 = vadd.f32 %v1576, %v1721
    %v1754 = vadd.f32 %v1605, %v1722
    %v1755 = vadd.f32 %v1634, %v1723
    %v1756 = vadd.f32 %v1549, %v1724
    %v1757 = vadd.f32 %v1578, %v1725
    %v1758 = vadd.f32 %v1607, %v1726
    %v1759 = vadd.f32 %v1636, %v1727
    %v1760 = vadd.f32 %v1552, %v1728
    %v1761 = vadd.f32 %v1581, %v1729
    %v1762 = vadd.f32 %v1610, %v1730
    %v1763 = vadd.f32 %v1639, %v1731
    %v1764 = vadd.f32 %v1554, %v1732
    %v1765 = vadd.f32 %v1583, %v1733
    %v1766 = vadd.f32 %v1612, %v1734
    %v1767 = vadd.f32 %v1641, %v1735
    %v1768 = vadd.f32 %v1557, %v1736
    %v1769 = vadd.f32 %v1586, %v1737
    %v1770 = vadd.f32 %v1615, %v1738
    %v1771 = vadd.f32 %v1644, %v1739
    %v1772 = vadd.f32 %v1559, %v1740
    %v1773 = vadd.f32 %v1588, %v1741
    %v1774 = vadd.f32 %v1617, %v1742
    %v1775 = vadd.f32 %v1646, %v1743
    %v1776 = vmul.f32 %v1744, 1.5957692
    %v1777 = vmul.f32 %v1745, 1.5957692
    %v1778 = vmul.f32 %v1746, 1.5957692
    %v1779 = vmul.f32 %v1747, 1.5957692
    %v1780 = vmul.f32 %v1748, 1.5957692
    %v1781 = vmul.f32 %v1749, 1.5957692
    %v1782 = vmul.f32 %v1750, 1.5957692
    %v1783 = vmul.f32 %v1751, 1.5957692
    %v1784 = vmul.f32 %v1752, 1.5957692
    %v1785 = vmul.f32 %v1753, 1.5957692
    %v1786 = vmul.f32 %v1754, 1.5957692
    %v1787 = vmul.f32 %v1755, 1.5957692
    %v1788 = vmul.f32 %v1756, 1.5957692
    %v1789 = vmul.f32 %v1757, 1.5957692
    %v1790 = vmul.f32 %v1758, 1.5957692
    %v1791 = vmul.f32 %v1759, 1.5957692
    %v1792 = vmul.f32 %v1760, 1.5957692
    %v1793 = vmul.f32 %v1761, 1.5957692
    %v1794 = vmul.f32 %v1762, 1.5957692
    %v1795 = vmul.f32 %v1763, 1.5957692
    %v1796 = vmul.f32 %v1764, 1.5957692
    %v1797 = vmul.f32 %v1765, 1.5957692
    %v1798 = vmul.f32 %v1766, 1.5957692
    %v1799 = vmul.f32 %v1767, 1.5957692
    %v1800 = vmul.f32 %v1768, 1.5957692
    %v1801 = vmul.f32 %v1769, 1.5957692
    %v1802 = vmul.f32 %v1770, 1.5957692
    %v1803 = vmul.f32 %v1771, 1.5957692
    %v1804 = vmul.f32 %v1772, 1.5957692
    %v1805 = vmul.f32 %v1773, 1.5957692
    %v1806 = vmul.f32 %v1774, 1.5957692
    %v1807 = vmul.f32 %v1775, 1.5957692
    %v1808 = vxor.u32 %v1776, 2147483648
    %v1809 = vxor.u32 %v1777, 2147483648
    %v1810 = vxor.u32 %v1778, 2147483648
    %v1811 = vxor.u32 %v1779, 2147483648
    %v1812 = vxor.u32 %v1780, 2147483648
    %v1813 = vxor.u32 %v1781, 2147483648
    %v1814 = vxor.u32 %v1782, 2147483648
    %v1815 = vxor.u32 %v1783, 2147483648
    %v1816 = vxor.u32 %v1784, 2147483648
    %v1817 = vxor.u32 %v1785, 2147483648
    %v1818 = vxor.u32 %v1786, 2147483648
    %v1819 = vxor.u32 %v1787, 2147483648
    %v1820 = vxor.u32 %v1788, 2147483648
    %v1821 = vxor.u32 %v1789, 2147483648
    %v1822 = vxor.u32 %v1790, 2147483648
    %v1823 = vxor.u32 %v1791, 2147483648
    %v1824 = vxor.u32 %v1792, 2147483648
    %v1825 = vxor.u32 %v1793, 2147483648
    %v1826 = vxor.u32 %v1794, 2147483648
    %v1827 = vxor.u32 %v1795, 2147483648
    %v1828 = vxor.u32 %v1796, 2147483648
    %v1829 = vxor.u32 %v1797, 2147483648
    %v1830 = vxor.u32 %v1798, 2147483648
    %v1831 = vxor.u32 %v1799, 2147483648
    %v1832 = vxor.u32 %v1800, 2147483648
    %v1833 = vxor.u32 %v1801, 2147483648
    %v1834 = vxor.u32 %v1802, 2147483648
    %v1835 = vxor.u32 %v1803, 2147483648
    %v1836 = vxor.u32 %v1804, 2147483648
    %v1837 = vxor.u32 %v1805, 2147483648
    %v1838 = vxor.u32 %v1806, 2147483648
    %v1839 = vxor.u32 %v1807, 2147483648
    %v1840 = vmul.f32 %v1808, 1.442695
    %v1841 = vpow.pop %v1840
    %v1842 = vmul.f32 %v1809, 1.442695
    %v1843 = vpow.pop %v1842
    %v1844 = vmul.f32 %v1810, 1.442695
    %v1845 = vpow.pop %v1844
    %v1846 = vmul.f32 %v1811, 1.442695
    %v1847 = vpow.pop %v1846
    %v1848 = vmul.f32 %v1812, 1.442695
    %v1849 = vpow.pop %v1848
    %v1850 = vmul.f32 %v1813, 1.442695
    %v1851 = vpow.pop %v1850
    %v1852 = vmul.f32 %v1814, 1.442695
    %v1853 = vpow.pop %v1852
    %v1854 = vmul.f32 %v1815, 1.442695
    %v1855 = vpow.pop %v1854
    %v1856 = vmul.f32 %v1816, 1.442695
    %v1857 = vpow.pop %v1856
    %v1858 = vmul.f32 %v1817, 1.442695
    %v1859 = vpow.pop %v1858
    %v1860 = vmul.f32 %v1818, 1.442695
    %v1861 = vpow.pop %v1860
    %v1862 = vmul.f32 %v1819, 1.442695
    %v1863 = vpow.pop %v1862
    %v1864 = vmul.f32 %v1820, 1.442695
    %v1865 = vpow.pop %v1864
    %v1866 = vmul.f32 %v1821, 1.442695
    %v1867 = vpow.pop %v1866
    %v1868 = vmul.f32 %v1822, 1.442695
    %v1869 = vpow.pop %v1868
    %v1870 = vmul.f32 %v1823, 1.442695
    %v1871 = vpow.pop %v1870
    %v1872 = vmul.f32 %v1824, 1.442695
    %v1873 = vpow.pop %v1872
    %v1874 = vmul.f32 %v1825, 1.442695
    %v1875 = vpow.pop %v1874
    %v1876 = vmul.f32 %v1826, 1.442695
    %v1877 = vpow.pop %v1876
    %v1878 = vmul.f32 %v1827, 1.442695
    %v1879 = vpow.pop %v1878
    %v1880 = vmul.f32 %v1828, 1.442695
    %v1881 = vpow.pop %v1880
    %v1882 = vmul.f32 %v1829, 1.442695
    %v1883 = vpow.pop %v1882
    %v1884 = vmul.f32 %v1830, 1.442695
    %v1885 = vpow.pop %v1884
    %v1886 = vmul.f32 %v1831, 1.442695
    %v1887 = vpow.pop %v1886
    %v1888 = vmul.f32 %v1832, 1.442695
    %v1889 = vpow.pop %v1888
    %v1890 = vmul.f32 %v1833, 1.442695
    %v1891 = vpow.pop %v1890
    %v1892 = vmul.f32 %v1834, 1.442695
    %v1893 = vpow.pop %v1892
    %v1894 = vmul.f32 %v1835, 1.442695
    %v1895 = vpow.pop %v1894
    %v1896 = vmul.f32 %v1836, 1.442695
    %v1897 = vpow.pop %v1896
    %v1898 = vmul.f32 %v1837, 1.442695
    %v1899 = vpow.pop %v1898
    %v1900 = vmul.f32 %v1838, 1.442695
    %v1901 = vpow.pop %v1900
    %v1902 = vmul.f32 %v1839, 1.442695
    %v1903 = vpow.pop %v1902
    %v1904 = vadd.f32 %v1841, 1.0
    %v1905 = vadd.f32 %v1843, 1.0
    %v1906 = vadd.f32 %v1845, 1.0
    %v1907 = vadd.f32 %v1847, 1.0
    %v1908 = vadd.f32 %v1849, 1.0
    %v1909 = vadd.f32 %v1851, 1.0
    %v1910 = vadd.f32 %v1853, 1.0
    %v1911 = vadd.f32 %v1855, 1.0
    %v1912 = vadd.f32 %v1857, 1.0
    %v1913 = vadd.f32 %v1859, 1.0
    %v1914 = vadd.f32 %v1861, 1.0
    %v1915 = vadd.f32 %v1863, 1.0
    %v1916 = vadd.f32 %v1865, 1.0
    %v1917 = vadd.f32 %v1867, 1.0
    %v1918 = vadd.f32 %v1869, 1.0
    %v1919 = vadd.f32 %v1871, 1.0
    %v1920 = vadd.f32 %v1873, 1.0
    %v1921 = vadd.f32 %v1875, 1.0
    %v1922 = vadd.f32 %v1877, 1.0
    %v1923 = vadd.f32 %v1879, 1.0
    %v1924 = vadd.f32 %v1881, 1.0
    %v1925 = vadd.f32 %v1883, 1.0
    %v1926 = vadd.f32 %v1885, 1.0
    %v1927 = vadd.f32 %v1887, 1.0
    %v1928 = vadd.f32 %v1889, 1.0
    %v1929 = vadd.f32 %v1891, 1.0
    %v1930 = vadd.f32 %v1893, 1.0
    %v1931 = vadd.f32 %v1895, 1.0
    %v1932 = vadd.f32 %v1897, 1.0
    %v1933 = vadd.f32 %v1899, 1.0
    %v1934 = vadd.f32 %v1901, 1.0
    %v1935 = vadd.f32 %v1903, 1.0
    %v1936 = vrcp.pop %v1904
    %v1937 = vmul.f32 %v1904, %v1936
    %v1938 = vsub.f32 1.0, %v1937
    %v1939 = vmul.f32 %v1936, %v1938
    %v1940 = vadd.f32 %v1936, %v1939
    %vm1941 = vweird.f32 %v1904
    %vm1942 = vweird.f32 %v1936
    %vm1943 = vmor %vm1941, %vm1942
    %v1944 = vsel %vm1943, %v1936, %v1940
    %v1945 = vand.u32 2147483647, %v1904
    %vm1946 = vcmp.eq.f32.partialorder %v1945, 8.507059e+37
    %v1947 = vand.u32 %v1904, 2147483648
    %v1948 = vor.u32 1.1754944e-38, %v1947
    %v1949 = vsel %vm1946, %v1948, %v1944
    %v1950 = vmul.f32 1.0, %v1949
    %v1951 = vrcp.pop %v1905
    %v1952 = vmul.f32 %v1905, %v1951
    %v1953 = vsub.f32 1.0, %v1952
    %v1954 = vmul.f32 %v1951, %v1953
    %v1955 = vadd.f32 %v1951, %v1954
    %vm1956 = vweird.f32 %v1905
    %vm1957 = vweird.f32 %v1951
    %vm1958 = vmor %vm1956, %vm1957
    %v1959 = vsel %vm1958, %v1951, %v1955
    %v1960 = vand.u32 2147483647, %v1905
    %vm1961 = vcmp.eq.f32.partialorder %v1960, 8.507059e+37
    %v1962 = vand.u32 %v1905, 2147483648
    %v1963 = vor.u32 1.1754944e-38, %v1962
    %v1964 = vsel %vm1961, %v1963, %v1959
    %v1965 = vmul.f32 1.0, %v1964
    %v1966 = vrcp.pop %v1906
    %v1967 = vmul.f32 %v1906, %v1966
    %v1968 = vsub.f32 1.0, %v1967
    %v1969 = vmul.f32 %v1966, %v1968
    %v1970 = vadd.f32 %v1966, %v1969
    %vm1971 = vweird.f32 %v1906
    %vm1972 = vweird.f32 %v1966
    %vm1973 = vmor %vm1971, %vm1972
    %v1974 = vsel %vm1973, %v1966, %v1970
    %v1975 = vand.u32 2147483647, %v1906
    %vm1976 = vcmp.eq.f32.partialorder %v1975, 8.507059e+37
    %v1977 = vand.u32 %v1906, 2147483648
    %v1978 = vor.u32 1.1754944e-38, %v1977
    %v1979 = vsel %vm1976, %v1978, %v1974
    %v1980 = vmul.f32 1.0, %v1979
    %v1981 = vrcp.pop %v1907
    %v1982 = vmul.f32 %v1907, %v1981
    %v1983 = vsub.f32 1.0, %v1982
    %v1984 = vmul.f32 %v1981, %v1983
    %v1985 = vadd.f32 %v1981, %v1984
    %vm1986 = vweird.f32 %v1907
    %vm1987 = vweird.f32 %v1981
    %vm1988 = vmor %vm1986, %vm1987
    %v1989 = vsel %vm1988, %v1981, %v1985
    %v1990 = vand.u32 2147483647, %v1907
    %vm1991 = vcmp.eq.f32.partialorder %v1990, 8.507059e+37
    %v1992 = vand.u32 %v1907, 2147483648
    %v1993 = vor.u32 1.1754944e-38, %v1992
    %v1994 = vsel %vm1991, %v1993, %v1989
    %v1995 = vmul.f32 1.0, %v1994
    %v1996 = vrcp.pop %v1908
    %v1997 = vmul.f32 %v1908, %v1996
    %v1998 = vsub.f32 1.0, %v1997
    %v1999 = vmul.f32 %v1996, %v1998
    %v2000 = vadd.f32 %v1996, %v1999
    %vm2001 = vweird.f32 %v1908
    %vm2002 = vweird.f32 %v1996
    %vm2003 = vmor %vm2001, %vm2002
    %v2004 = vsel %vm2003, %v1996, %v2000
    %v2005 = vand.u32 2147483647, %v1908
    %vm2006 = vcmp.eq.f32.partialorder %v2005, 8.507059e+37
    %v2007 = vand.u32 %v1908, 2147483648
    %v2008 = vor.u32 1.1754944e-38, %v2007
    %v2009 = vsel %vm2006, %v2008, %v2004
    %v2010 = vmul.f32 1.0, %v2009
    %v2011 = vrcp.pop %v1909
    %v2012 = vmul.f32 %v1909, %v2011
    %v2013 = vsub.f32 1.0, %v2012
    %v2014 = vmul.f32 %v2011, %v2013
    %v2015 = vadd.f32 %v2011, %v2014
    %vm2016 = vweird.f32 %v1909
    %vm2017 = vweird.f32 %v2011
    %vm2018 = vmor %vm2016, %vm2017
    %v2019 = vsel %vm2018, %v2011, %v2015
    %v2020 = vand.u32 2147483647, %v1909
    %vm2021 = vcmp.eq.f32.partialorder %v2020, 8.507059e+37
    %v2022 = vand.u32 %v1909, 2147483648
    %v2023 = vor.u32 1.1754944e-38, %v2022
    %v2024 = vsel %vm2021, %v2023, %v2019
    %v2025 = vmul.f32 1.0, %v2024
    %v2026 = vrcp.pop %v1910
    %v2027 = vmul.f32 %v1910, %v2026
    %v2028 = vsub.f32 1.0, %v2027
    %v2029 = vmul.f32 %v2026, %v2028
    %v2030 = vadd.f32 %v2026, %v2029
    %vm2031 = vweird.f32 %v1910
    %vm2032 = vweird.f32 %v2026
    %vm2033 = vmor %vm2031, %vm2032
    %v2034 = vsel %vm2033, %v2026, %v2030
    %v2035 = vand.u32 2147483647, %v1910
    %vm2036 = vcmp.eq.f32.partialorder %v2035, 8.507059e+37
    %v2037 = vand.u32 %v1910, 2147483648
    %v2038 = vor.u32 1.1754944e-38, %v2037
    %v2039 = vsel %vm2036, %v2038, %v2034
    %v2040 = vmul.f32 1.0, %v2039
    %v2041 = vrcp.pop %v1911
    %v2042 = vmul.f32 %v1911, %v2041
    %v2043 = vsub.f32 1.0, %v2042
    %v2044 = vmul.f32 %v2041, %v2043
    %v2045 = vadd.f32 %v2041, %v2044
    %vm2046 = vweird.f32 %v1911
    %vm2047 = vweird.f32 %v2041
    %vm2048 = vmor %vm2046, %vm2047
    %v2049 = vsel %vm2048, %v2041, %v2045
    %v2050 = vand.u32 2147483647, %v1911
    %vm2051 = vcmp.eq.f32.partialorder %v2050, 8.507059e+37
    %v2052 = vand.u32 %v1911, 2147483648
    %v2053 = vor.u32 1.1754944e-38, %v2052
    %v2054 = vsel %vm2051, %v2053, %v2049
    %v2055 = vmul.f32 1.0, %v2054
    %v2056 = vrcp.pop %v1912
    %v2057 = vmul.f32 %v1912, %v2056
    %v2058 = vsub.f32 1.0, %v2057
    %v2059 = vmul.f32 %v2056, %v2058
    %v2060 = vadd.f32 %v2056, %v2059
    %vm2061 = vweird.f32 %v1912
    %vm2062 = vweird.f32 %v2056
    %vm2063 = vmor %vm2061, %vm2062
    %v2064 = vsel %vm2063, %v2056, %v2060
    %v2065 = vand.u32 2147483647, %v1912
    %vm2066 = vcmp.eq.f32.partialorder %v2065, 8.507059e+37
    %v2067 = vand.u32 %v1912, 2147483648
    %v2068 = vor.u32 1.1754944e-38, %v2067
    %v2069 = vsel %vm2066, %v2068, %v2064
    %v2070 = vmul.f32 1.0, %v2069
    %v2071 = vrcp.pop %v1913
    %v2072 = vmul.f32 %v1913, %v2071
    %v2073 = vsub.f32 1.0, %v2072
    %v2074 = vmul.f32 %v2071, %v2073
    %v2075 = vadd.f32 %v2071, %v2074
    %vm2076 = vweird.f32 %v1913
    %vm2077 = vweird.f32 %v2071
    %vm2078 = vmor %vm2076, %vm2077
    %v2079 = vsel %vm2078, %v2071, %v2075
    %v2080 = vand.u32 2147483647, %v1913
    %vm2081 = vcmp.eq.f32.partialorder %v2080, 8.507059e+37
    %v2082 = vand.u32 %v1913, 2147483648
    %v2083 = vor.u32 1.1754944e-38, %v2082
    %v2084 = vsel %vm2081, %v2083, %v2079
    %v2085 = vmul.f32 1.0, %v2084
    %v2086 = vrcp.pop %v1914
    %v2087 = vmul.f32 %v1914, %v2086
    %v2088 = vsub.f32 1.0, %v2087
    %v2089 = vmul.f32 %v2086, %v2088
    %v2090 = vadd.f32 %v2086, %v2089
    %vm2091 = vweird.f32 %v1914
    %vm2092 = vweird.f32 %v2086
    %vm2093 = vmor %vm2091, %vm2092
    %v2094 = vsel %vm2093, %v2086, %v2090
    %v2095 = vand.u32 2147483647, %v1914
    %vm2096 = vcmp.eq.f32.partialorder %v2095, 8.507059e+37
    %v2097 = vand.u32 %v1914, 2147483648
    %v2098 = vor.u32 1.1754944e-38, %v2097
    %v2099 = vsel %vm2096, %v2098, %v2094
    %v2100 = vmul.f32 1.0, %v2099
    %v2101 = vrcp.pop %v1915
    %v2102 = vmul.f32 %v1915, %v2101
    %v2103 = vsub.f32 1.0, %v2102
    %v2104 = vmul.f32 %v2101, %v2103
    %v2105 = vadd.f32 %v2101, %v2104
    %vm2106 = vweird.f32 %v1915
    %vm2107 = vweird.f32 %v2101
    %vm2108 = vmor %vm2106, %vm2107
    %v2109 = vsel %vm2108, %v2101, %v2105
    %v2110 = vand.u32 2147483647, %v1915
    %vm2111 = vcmp.eq.f32.partialorder %v2110, 8.507059e+37
    %v2112 = vand.u32 %v1915, 2147483648
    %v2113 = vor.u32 1.1754944e-38, %v2112
    %v2114 = vsel %vm2111, %v2113, %v2109
    %v2115 = vmul.f32 1.0, %v2114
    %v2116 = vrcp.pop %v1916
    %v2117 = vmul.f32 %v1916, %v2116
    %v2118 = vsub.f32 1.0, %v2117
    %v2119 = vmul.f32 %v2116, %v2118
    %v2120 = vadd.f32 %v2116, %v2119
    %vm2121 = vweird.f32 %v1916
    %vm2122 = vweird.f32 %v2116
    %vm2123 = vmor %vm2121, %vm2122
    %v2124 = vsel %vm2123, %v2116, %v2120
    %v2125 = vand.u32 2147483647, %v1916
    %vm2126 = vcmp.eq.f32.partialorder %v2125, 8.507059e+37
    %v2127 = vand.u32 %v1916, 2147483648
    %v2128 = vor.u32 1.1754944e-38, %v2127
    %v2129 = vsel %vm2126, %v2128, %v2124
    %v2130 = vmul.f32 1.0, %v2129
    %v2131 = vrcp.pop %v1917
    %v2132 = vmul.f32 %v1917, %v2131
    %v2133 = vsub.f32 1.0, %v2132
    %v2134 = vmul.f32 %v2131, %v2133
    %v2135 = vadd.f32 %v2131, %v2134
    %vm2136 = vweird.f32 %v1917
    %vm2137 = vweird.f32 %v2131
    %vm2138 = vmor %vm2136, %vm2137
    %v2139 = vsel %vm2138, %v2131, %v2135
    %v2140 = vand.u32 2147483647, %v1917
    %vm2141 = vcmp.eq.f32.partialorder %v2140, 8.507059e+37
    %v2142 = vand.u32 %v1917, 2147483648
    %v2143 = vor.u32 1.1754944e-38, %v2142
    %v2144 = vsel %vm2141, %v2143, %v2139
    %v2145 = vmul.f32 1.0, %v2144
    %v2146 = vrcp.pop %v1918
    %v2147 = vmul.f32 %v1918, %v2146
    %v2148 = vsub.f32 1.0, %v2147
    %v2149 = vmul.f32 %v2146, %v2148
    %v2150 = vadd.f32 %v2146, %v2149
    %vm2151 = vweird.f32 %v1918
    %vm2152 = vweird.f32 %v2146
    %vm2153 = vmor %vm2151, %vm2152
    %v2154 = vsel %vm2153, %v2146, %v2150
    %v2155 = vand.u32 2147483647, %v1918
    %vm2156 = vcmp.eq.f32.partialorder %v2155, 8.507059e+37
    %v2157 = vand.u32 %v1918, 2147483648
    %v2158 = vor.u32 1.1754944e-38, %v2157
    %v2159 = vsel %vm2156, %v2158, %v2154
    %v2160 = vmul.f32 1.0, %v2159
    %v2161 = vrcp.pop %v1919
    %v2162 = vmul.f32 %v1919, %v2161
    %v2163 = vsub.f32 1.0, %v2162
    %v2164 = vmul.f32 %v2161, %v2163
    %v2165 = vadd.f32 %v2161, %v2164
    %vm2166 = vweird.f32 %v1919
    %vm2167 = vweird.f32 %v2161
    %vm2168 = vmor %vm2166, %vm2167
    %v2169 = vsel %vm2168, %v2161, %v2165
    %v2170 = vand.u32 2147483647, %v1919
    %vm2171 = vcmp.eq.f32.partialorder %v2170, 8.507059e+37
    %v2172 = vand.u32 %v1919, 2147483648
    %v2173 = vor.u32 1.1754944e-38, %v2172
    %v2174 = vsel %vm2171, %v2173, %v2169
    %v2175 = vmul.f32 1.0, %v2174
    %v2176 = vrcp.pop %v1920
    %v2177 = vmul.f32 %v1920, %v2176
    %v2178 = vsub.f32 1.0, %v2177
    %v2179 = vmul.f32 %v2176, %v2178
    %v2180 = vadd.f32 %v2176, %v2179
    %vm2181 = vweird.f32 %v1920
    %vm2182 = vweird.f32 %v2176
    %vm2183 = vmor %vm2181, %vm2182
    %v2184 = vsel %vm2183, %v2176, %v2180
    %v2185 = vand.u32 2147483647, %v1920
    %vm2186 = vcmp.eq.f32.partialorder %v2185, 8.507059e+37
    %v2187 = vand.u32 %v1920, 2147483648
    %v2188 = vor.u32 1.1754944e-38, %v2187
    %v2189 = vsel %vm2186, %v2188, %v2184
    %v2190 = vmul.f32 1.0, %v2189
    %v2191 = vrcp.pop %v1921
    %v2192 = vmul.f32 %v1921, %v2191
    %v2193 = vsub.f32 1.0, %v2192
    %v2194 = vmul.f32 %v2191, %v2193
    %v2195 = vadd.f32 %v2191, %v2194
    %vm2196 = vweird.f32 %v1921
    %vm2197 = vweird.f32 %v2191
    %vm2198 = vmor %vm2196, %vm2197
    %v2199 = vsel %vm2198, %v2191, %v2195
    %v2200 = vand.u32 2147483647, %v1921
    %vm2201 = vcmp.eq.f32.partialorder %v2200, 8.507059e+37
    %v2202 = vand.u32 %v1921, 2147483648
    %v2203 = vor.u32 1.1754944e-38, %v2202
    %v2204 = vsel %vm2201, %v2203, %v2199
    %v2205 = vmul.f32 1.0, %v2204
    %v2206 = vrcp.pop %v1922
    %v2207 = vmul.f32 %v1922, %v2206
    %v2208 = vsub.f32 1.0, %v2207
    %v2209 = vmul.f32 %v2206, %v2208
    %v2210 = vadd.f32 %v2206, %v2209
    %vm2211 = vweird.f32 %v1922
    %vm2212 = vweird.f32 %v2206
    %vm2213 = vmor %vm2211, %vm2212
    %v2214 = vsel %vm2213, %v2206, %v2210
    %v2215 = vand.u32 2147483647, %v1922
    %vm2216 = vcmp.eq.f32.partialorder %v2215, 8.507059e+37
    %v2217 = vand.u32 %v1922, 2147483648
    %v2218 = vor.u32 1.1754944e-38, %v2217
    %v2219 = vsel %vm2216, %v2218, %v2214
    %v2220 = vmul.f32 1.0, %v2219
    %v2221 = vrcp.pop %v1923
    %v2222 = vmul.f32 %v1923, %v2221
    %v2223 = vsub.f32 1.0, %v2222
    %v2224 = vmul.f32 %v2221, %v2223
    %v2225 = vadd.f32 %v2221, %v2224
    %vm2226 = vweird.f32 %v1923
    %vm2227 = vweird.f32 %v2221
    %vm2228 = vmor %vm2226, %vm2227
    %v2229 = vsel %vm2228, %v2221, %v2225
    %v2230 = vand.u32 2147483647, %v1923
    %vm2231 = vcmp.eq.f32.partialorder %v2230, 8.507059e+37
    %v2232 = vand.u32 %v1923, 2147483648
    %v2233 = vor.u32 1.1754944e-38, %v2232
    %v2234 = vsel %vm2231, %v2233, %v2229
    %v2235 = vmul.f32 1.0, %v2234
    %v2236 = vrcp.pop %v1924
    %v2237 = vmul.f32 %v1924, %v2236
    %v2238 = vsub.f32 1.0, %v2237
    %v2239 = vmul.f32 %v2236, %v2238
    %v2240 = vadd.f32 %v2236, %v2239
    %vm2241 = vweird.f32 %v1924
    %vm2242 = vweird.f32 %v2236
    %vm2243 = vmor %vm2241, %vm2242
    %v2244 = vsel %vm2243, %v2236, %v2240
    %v2245 = vand.u32 2147483647, %v1924
    %vm2246 = vcmp.eq.f32.partialorder %v2245, 8.507059e+37
    %v2247 = vand.u32 %v1924, 2147483648
    %v2248 = vor.u32 1.1754944e-38, %v2247
    %v2249 = vsel %vm2246, %v2248, %v2244
    %v2250 = vmul.f32 1.0, %v2249
    %v2251 = vrcp.pop %v1925
    %v2252 = vmul.f32 %v1925, %v2251
    %v2253 = vsub.f32 1.0, %v2252
    %v2254 = vmul.f32 %v2251, %v2253
    %v2255 = vadd.f32 %v2251, %v2254
    %vm2256 = vweird.f32 %v1925
    %vm2257 = vweird.f32 %v2251
    %vm2258 = vmor %vm2256, %vm2257
    %v2259 = vsel %vm2258, %v2251, %v2255
    %v2260 = vand.u32 2147483647, %v1925
    %vm2261 = vcmp.eq.f32.partialorder %v2260, 8.507059e+37
    %v2262 = vand.u32 %v1925, 2147483648
    %v2263 = vor.u32 1.1754944e-38, %v2262
    %v2264 = vsel %vm2261, %v2263, %v2259
    %v2265 = vmul.f32 1.0, %v2264
    %v2266 = vrcp.pop %v1926
    %v2267 = vmul.f32 %v1926, %v2266
    %v2268 = vsub.f32 1.0, %v2267
    %v2269 = vmul.f32 %v2266, %v2268
    %v2270 = vadd.f32 %v2266, %v2269
    %vm2271 = vweird.f32 %v1926
    %vm2272 = vweird.f32 %v2266
    %vm2273 = vmor %vm2271, %vm2272
    %v2274 = vsel %vm2273, %v2266, %v2270
    %v2275 = vand.u32 2147483647, %v1926
    %vm2276 = vcmp.eq.f32.partialorder %v2275, 8.507059e+37
    %v2277 = vand.u32 %v1926, 2147483648
    %v2278 = vor.u32 1.1754944e-38, %v2277
    %v2279 = vsel %vm2276, %v2278, %v2274
    %v2280 = vmul.f32 1.0, %v2279
    %v2281 = vrcp.pop %v1927
    %v2282 = vmul.f32 %v1927, %v2281
    %v2283 = vsub.f32 1.0, %v2282
    %v2284 = vmul.f32 %v2281, %v2283
    %v2285 = vadd.f32 %v2281, %v2284
    %vm2286 = vweird.f32 %v1927
    %vm2287 = vweird.f32 %v2281
    %vm2288 = vmor %vm2286, %vm2287
    %v2289 = vsel %vm2288, %v2281, %v2285
    %v2290 = vand.u32 2147483647, %v1927
    %vm2291 = vcmp.eq.f32.partialorder %v2290, 8.507059e+37
    %v2292 = vand.u32 %v1927, 2147483648
    %v2293 = vor.u32 1.1754944e-38, %v2292
    %v2294 = vsel %vm2291, %v2293, %v2289
    %v2295 = vmul.f32 1.0, %v2294
    %v2296 = vrcp.pop %v1928
    %v2297 = vmul.f32 %v1928, %v2296
    %v2298 = vsub.f32 1.0, %v2297
    %v2299 = vmul.f32 %v2296, %v2298
    %v2300 = vadd.f32 %v2296, %v2299
    %vm2301 = vweird.f32 %v1928
    %vm2302 = vweird.f32 %v2296
    %vm2303 = vmor %vm2301, %vm2302
    %v2304 = vsel %vm2303, %v2296, %v2300
    %v2305 = vand.u32 2147483647, %v1928
    %vm2306 = vcmp.eq.f32.partialorder %v2305, 8.507059e+37
    %v2307 = vand.u32 %v1928, 2147483648
    %v2308 = vor.u32 1.1754944e-38, %v2307
    %v2309 = vsel %vm2306, %v2308, %v2304
    %v2310 = vmul.f32 1.0, %v2309
    %v2311 = vrcp.pop %v1929
    %v2312 = vmul.f32 %v1929, %v2311
    %v2313 = vsub.f32 1.0, %v2312
    %v2314 = vmul.f32 %v2311, %v2313
    %v2315 = vadd.f32 %v2311, %v2314
    %vm2316 = vweird.f32 %v1929
    %vm2317 = vweird.f32 %v2311
    %vm2318 = vmor %vm2316, %vm2317
    %v2319 = vsel %vm2318, %v2311, %v2315
    %v2320 = vand.u32 2147483647, %v1929
    %vm2321 = vcmp.eq.f32.partialorder %v2320, 8.507059e+37
    %v2322 = vand.u32 %v1929, 2147483648
    %v2323 = vor.u32 1.1754944e-38, %v2322
    %v2324 = vsel %vm2321, %v2323, %v2319
    %v2325 = vmul.f32 1.0, %v2324
    %v2326 = vrcp.pop %v1930
    %v2327 = vmul.f32 %v1930, %v2326
    %v2328 = vsub.f32 1.0, %v2327
    %v2329 = vmul.f32 %v2326, %v2328
    %v2330 = vadd.f32 %v2326, %v2329
    %vm2331 = vweird.f32 %v1930
    %vm2332 = vweird.f32 %v2326
    %vm2333 = vmor %vm2331, %vm2332
    %v2334 = vsel %vm2333, %v2326, %v2330
    %v2335 = vand.u32 2147483647, %v1930
    %vm2336 = vcmp.eq.f32.partialorder %v2335, 8.507059e+37
    %v2337 = vand.u32 %v1930, 2147483648
    %v2338 = vor.u32 1.1754944e-38, %v2337
    %v2339 = vsel %vm2336, %v2338, %v2334
    %v2340 = vmul.f32 1.0, %v2339
    %v2341 = vrcp.pop %v1931
    %v2342 = vmul.f32 %v1931, %v2341
    %v2343 = vsub.f32 1.0, %v2342
    %v2344 = vmul.f32 %v2341, %v2343
    %v2345 = vadd.f32 %v2341, %v2344
    %vm2346 = vweird.f32 %v1931
    %vm2347 = vweird.f32 %v2341
    %vm2348 = vmor %vm2346, %vm2347
    %v2349 = vsel %vm2348, %v2341, %v2345
    %v2350 = vand.u32 2147483647, %v1931
    %vm2351 = vcmp.eq.f32.partialorder %v2350, 8.507059e+37
    %v2352 = vand.u32 %v1931, 2147483648
    %v2353 = vor.u32 1.1754944e-38, %v2352
    %v2354 = vsel %vm2351, %v2353, %v2349
    %v2355 = vmul.f32 1.0, %v2354
    %v2356 = vrcp.pop %v1932
    %v2357 = vmul.f32 %v1932, %v2356
    %v2358 = vsub.f32 1.0, %v2357
    %v2359 = vmul.f32 %v2356, %v2358
    %v2360 = vadd.f32 %v2356, %v2359
    %vm2361 = vweird.f32 %v1932
    %vm2362 = vweird.f32 %v2356
    %vm2363 = vmor %vm2361, %vm2362
    %v2364 = vsel %vm2363, %v2356, %v2360
    %v2365 = vand.u32 2147483647, %v1932
    %vm2366 = vcmp.eq.f32.partialorder %v2365, 8.507059e+37
    %v2367 = vand.u32 %v1932, 2147483648
    %v2368 = vor.u32 1.1754944e-38, %v2367
    %v2369 = vsel %vm2366, %v2368, %v2364
    %v2370 = vmul.f32 1.0, %v2369
    %v2371 = vrcp.pop %v1933
    %v2372 = vmul.f32 %v1933, %v2371
    %v2373 = vsub.f32 1.0, %v2372
    %v2374 = vmul.f32 %v2371, %v2373
    %v2375 = vadd.f32 %v2371, %v2374
    %vm2376 = vweird.f32 %v1933
    %vm2377 = vweird.f32 %v2371
    %vm2378 = vmor %vm2376, %vm2377
    %v2379 = vsel %vm2378, %v2371, %v2375
    %v2380 = vand.u32 2147483647, %v1933
    %vm2381 = vcmp.eq.f32.partialorder %v2380, 8.507059e+37
    %v2382 = vand.u32 %v1933, 2147483648
    %v2383 = vor.u32 1.1754944e-38, %v2382
    %v2384 = vsel %vm2381, %v2383, %v2379
    %v2385 = vmul.f32 1.0, %v2384
    %v2386 = vrcp.pop %v1934
    %v2387 = vmul.f32 %v1934, %v2386
    %v2388 = vsub.f32 1.0, %v2387
    %v2389 = vmul.f32 %v2386, %v2388
    %v2390 = vadd.f32 %v2386, %v2389
    %vm2391 = vweird.f32 %v1934
    %vm2392 = vweird.f32 %v2386
    %vm2393 = vmor %vm2391, %vm2392
    %v2394 = vsel %vm2393, %v2386, %v2390
    %v2395 = vand.u32 2147483647, %v1934
    %vm2396 = vcmp.eq.f32.partialorder %v2395, 8.507059e+37
    %v2397 = vand.u32 %v1934, 2147483648
    %v2398 = vor.u32 1.1754944e-38, %v2397
    %v2399 = vsel %vm2396, %v2398, %v2394
    %v2400 = vmul.f32 1.0, %v2399
    %v2401 = vrcp.pop %v1935
    %v2402 = vmul.f32 %v1935, %v2401
    %v2403 = vsub.f32 1.0, %v2402
    %v2404 = vmul.f32 %v2401, %v2403
    %v2405 = vadd.f32 %v2401, %v2404
    %vm2406 = vweird.f32 %v1935
    %vm2407 = vweird.f32 %v2401
    %vm2408 = vmor %vm2406, %vm2407
    %v2409 = vsel %vm2408, %v2401, %v2405
    %v2410 = vand.u32 2147483647, %v1935
    %vm2411 = vcmp.eq.f32.partialorder %v2410, 8.507059e+37
    %v2412 = vand.u32 %v1935, 2147483648
    %v2413 = vor.u32 1.1754944e-38, %v2412
    %v2414 = vsel %vm2411, %v2413, %v2409
    %v2415 = vmul.f32 1.0, %v2414
    %v2416 = vmul.f32 %v1542, %v1950
    %v2417 = vmul.f32 %v1571, %v1965
    %v2418 = vmul.f32 %v1600, %v1980
    %v2419 = vmul.f32 %v1629, %v1995
    %v2420 = vmul.f32 %v1544, %v2010
    %v2421 = vmul.f32 %v1573, %v2025
    %v2422 = vmul.f32 %v1602, %v2040
    %v2423 = vmul.f32 %v1631, %v2055
    %v2424 = vmul.f32 %v1547, %v2070
    %v2425 = vmul.f32 %v1576, %v2085
    %v2426 = vmul.f32 %v1605, %v2100
    %v2427 = vmul.f32 %v1634, %v2115
    %v2428 = vmul.f32 %v1549, %v2130
    %v2429 = vmul.f32 %v1578, %v2145
    %v2430 = vmul.f32 %v1607, %v2160
    %v2431 = vmul.f32 %v1636, %v2175
    %v2432 = vmul.f32 %v1552, %v2190
    %v2433 = vmul.f32 %v1581, %v2205
    %v2434 = vmul.f32 %v1610, %v2220
    %v2435 = vmul.f32 %v1639, %v2235
    %v2436 = vmul.f32 %v1554, %v2250
    %v2437 = vmul.f32 %v1583, %v2265
    %v2438 = vmul.f32 %v1612, %v2280
    %v2439 = vmul.f32 %v1641, %v2295
    %v2440 = vmul.f32 %v1557, %v2310
    %v2441 = vmul.f32 %v1586, %v2325
    %v2442 = vmul.f32 %v1615, %v2340
    %v2443 = vmul.f32 %v1644, %v2355
    %v2444 = vmul.f32 %v1559, %v2370
    %v2445 = vmul.f32 %v1588, %v2385
    %v2446 = vmul.f32 %v1617, %v2400
    %v2447 = vmul.f32 %v1646, %v2415
    %v2448 = vpack.c.bf16 %v2420, %v2416
    %v2449 = vpack.c.bf16 %v2421, %v2417
    %v2450 = vpack.c.bf16 %v2422, %v2418
    %v2451 = vpack.c.bf16 %v2423, %v2419
    %v2452 = vpack.c.bf16 %v2428, %v2424
    %v2453 = vpack.c.bf16 %v2429, %v2425
    %v2454 = vpack.c.bf16 %v2430, %v2426
    %v2455 = vpack.c.bf16 %v2431, %v2427
    %v2456 = vpack.c.bf16 %v2436, %v2432
    %v2457 = vpack.c.bf16 %v2437, %v2433
    %v2458 = vpack.c.bf16 %v2438, %v2434
    %v2459 = vpack.c.bf16 %v2439, %v2435
    %v2460 = vpack.c.bf16 %v2444, %v2440
    %v2461 = vpack.c.bf16 %v2445, %v2441
    %v2462 = vpack.c.bf16 %v2446, %v2442
    %v2463 = vpack.c.bf16 %v2447, %v2443
    %v2464 = vld [vmem:[#allocation10] sm:$0xf]
    %v2465 = vld [vmem:[#allocation10 + $0x4] sm:$0xf]
    %v2466 = vld [vmem:[#allocation10 + $0x8] sm:$0xf]
    %v2467 = vld [vmem:[#allocation10 + $0xc] sm:$0xf]
    %v2468 = vld [vmem:[#allocation10 + $0x10] sm:$0xf]
    %v2469 = vld [vmem:[#allocation10 + $0x14] sm:$0xf]
    %v2470 = vld [vmem:[#allocation10 + $0x18] sm:$0xf]
    %v2471 = vld [vmem:[#allocation10 + $0x1c] sm:$0xf]
    %v2472 = vld [vmem:[#allocation10 + $0x20] sm:$0xf]
    %v2473 = vld [vmem:[#allocation10 + $0x24] sm:$0xf]
    %v2474 = vld [vmem:[#allocation10 + $0x28] sm:$0xf]
    %v2475 = vld [vmem:[#allocation10 + $0x2c] sm:$0xf]
    %v2476 = vld [vmem:[#allocation10 + $0x30] sm:$0xf]
    %v2477 = vld [vmem:[#allocation10 + $0x34] sm:$0xf]
    %v2478 = vld [vmem:[#allocation10 + $0x38] sm:$0xf]
    %v2479 = vld [vmem:[#allocation10 + $0x3c] sm:$0xf]
    %v2480 = vld [vmem:[#allocation10 + $0x40] sm:$0xf]
    %v2481 = vld [vmem:[#allocation10 + $0x44] sm:$0xf]
    %v2482 = vld [vmem:[#allocation10 + $0x48] sm:$0xf]
    %v2483 = vld [vmem:[#allocation10 + $0x4c] sm:$0xf]
    %v2484 = vld [vmem:[#allocation10 + $0x50] sm:$0xf]
    %v2485 = vld [vmem:[#allocation10 + $0x54] sm:$0xf]
    %v2486 = vld [vmem:[#allocation10 + $0x58] sm:$0xf]
    %v2487 = vld [vmem:[#allocation10 + $0x5c] sm:$0xf]
    %v2488 = vld [vmem:[#allocation10 + $0x60] sm:$0xf]
    %v2489 = vld [vmem:[#allocation10 + $0x64] sm:$0xf]
    %v2490 = vld [vmem:[#allocation10 + $0x68] sm:$0xf]
    %v2491 = vld [vmem:[#allocation10 + $0x6c] sm:$0xf]
    %v2492 = vld [vmem:[#allocation10 + $0x70] sm:$0xf]
    %v2493 = vld [vmem:[#allocation10 + $0x74] sm:$0xf]
    %v2494 = vld [vmem:[#allocation10 + $0x78] sm:$0xf]
    %v2495 = vld [vmem:[#allocation10 + $0x7c] sm:$0xf]
    %v2496 = vld [vmem:[#allocation10 + $0x80] sm:$0xf]
    %v2497 = vld [vmem:[#allocation10 + $0x84] sm:$0xf]
    %v2498 = vld [vmem:[#allocation10 + $0x88] sm:$0xf]
    %v2499 = vld [vmem:[#allocation10 + $0x8c] sm:$0xf]
    %v2500 = vld [vmem:[#allocation10 + $0x90] sm:$0xf]
    %v2501 = vld [vmem:[#allocation10 + $0x94] sm:$0xf]
    %v2502 = vld [vmem:[#allocation10 + $0x98] sm:$0xf]
    %v2503 = vld [vmem:[#allocation10 + $0x9c] sm:$0xf]
    %v2504 = vld [vmem:[#allocation10 + $0xa0] sm:$0xf]
    %v2505 = vld [vmem:[#allocation10 + $0xa4] sm:$0xf]
    %v2506 = vld [vmem:[#allocation10 + $0xa8] sm:$0xf]
    %v2507 = vld [vmem:[#allocation10 + $0xac] sm:$0xf]
    %v2508 = vld [vmem:[#allocation10 + $0xb0] sm:$0xf]
    %v2509 = vld [vmem:[#allocation10 + $0xb4] sm:$0xf]
    %v2510 = vld [vmem:[#allocation10 + $0xb8] sm:$0xf]
    %v2511 = vld [vmem:[#allocation10 + $0xbc] sm:$0xf]
    %v2512 = vld [vmem:[#allocation10 + $0xc0] sm:$0xf]
    %v2513 = vld [vmem:[#allocation10 + $0xc4] sm:$0xf]
    %v2514 = vld [vmem:[#allocation10 + $0xc8] sm:$0xf]
    %v2515 = vld [vmem:[#allocation10 + $0xcc] sm:$0xf]
    %v2516 = vld [vmem:[#allocation10 + $0xd0] sm:$0xf]
    %v2517 = vld [vmem:[#allocation10 + $0xd4] sm:$0xf]
    %v2518 = vld [vmem:[#allocation10 + $0xd8] sm:$0xf]
    %v2519 = vld [vmem:[#allocation10 + $0xdc] sm:$0xf]
    %v2520 = vld [vmem:[#allocation10 + $0xe0] sm:$0xf]
    %v2521 = vld [vmem:[#allocation10 + $0xe4] sm:$0xf]
    %v2522 = vld [vmem:[#allocation10 + $0xe8] sm:$0xf]
    %v2523 = vld [vmem:[#allocation10 + $0xec] sm:$0xf]
    %v2524 = vld [vmem:[#allocation10 + $0xf0] sm:$0xf]
    %v2525 = vld [vmem:[#allocation10 + $0xf4] sm:$0xf]
    %v2526 = vld [vmem:[#allocation10 + $0xf8] sm:$0xf]
    %v2527 = vld [vmem:[#allocation10 + $0xfc] sm:$0xf]
    %v2528 = vperm.slane %v133, 0
    %v2593 = vunpack.c.l.b16 %v2464
    %v2594 = vunpack.c.l.b16 %v2465
    %v2595 = vunpack.c.l.b16 %v2466
    %v2596 = vunpack.c.l.b16 %v2467
    %v2597 = vunpack.c.l.b16 %v2468
    %v2598 = vunpack.c.l.b16 %v2469
    %v2599 = vunpack.c.l.b16 %v2470
    %v2600 = vunpack.c.l.b16 %v2471
    %v2601 = vunpack.c.l.b16 %v2472
    %v2602 = vunpack.c.l.b16 %v2473
    %v2603 = vunpack.c.l.b16 %v2474
    %v2604 = vunpack.c.l.b16 %v2475
    %v2605 = vunpack.c.l.b16 %v2476
    %v2606 = vunpack.c.l.b16 %v2477
    %v2607 = vunpack.c.l.b16 %v2478
    %v2608 = vunpack.c.l.b16 %v2479
    %v2609 = vunpack.c.l.b16 %v2480
    %v2610 = vunpack.c.l.b16 %v2481
    %v2611 = vunpack.c.l.b16 %v2482
    %v2612 = vunpack.c.l.b16 %v2483
    %v2613 = vunpack.c.l.b16 %v2484
    %v2614 = vunpack.c.l.b16 %v2485
    %v2615 = vunpack.c.l.b16 %v2486
    %v2616 = vunpack.c.l.b16 %v2487
    %v2617 = vunpack.c.l.b16 %v2488
    %v2618 = vunpack.c.l.b16 %v2489
    %v2619 = vunpack.c.l.b16 %v2490
    %v2620 = vunpack.c.l.b16 %v2491
    %v2621 = vunpack.c.l.b16 %v2492
    %v2622 = vunpack.c.l.b16 %v2493
    %v2623 = vunpack.c.l.b16 %v2494
    %v2624 = vunpack.c.l.b16 %v2495
    %v2625 = vunpack.c.l.b16 %v2496
    %v2626 = vunpack.c.l.b16 %v2497
    %v2627 = vunpack.c.l.b16 %v2498
    %v2628 = vunpack.c.l.b16 %v2499
    %v2629 = vunpack.c.l.b16 %v2500
    %v2630 = vunpack.c.l.b16 %v2501
    %v2631 = vunpack.c.l.b16 %v2502
    %v2632 = vunpack.c.l.b16 %v2503
    %v2633 = vunpack.c.l.b16 %v2504
    %v2634 = vunpack.c.l.b16 %v2505
    %v2635 = vunpack.c.l.b16 %v2506
    %v2636 = vunpack.c.l.b16 %v2507
    %v2637 = vunpack.c.l.b16 %v2508
    %v2638 = vunpack.c.l.b16 %v2509
    %v2639 = vunpack.c.l.b16 %v2510
    %v2640 = vunpack.c.l.b16 %v2511
    %v2641 = vunpack.c.l.b16 %v2512
    %v2642 = vunpack.c.l.b16 %v2513
    %v2643 = vunpack.c.l.b16 %v2514
    %v2644 = vunpack.c.l.b16 %v2515
    %v2645 = vunpack.c.l.b16 %v2516
    %v2646 = vunpack.c.l.b16 %v2517
    %v2647 = vunpack.c.l.b16 %v2518
    %v2648 = vunpack.c.l.b16 %v2519
    %v2649 = vunpack.c.l.b16 %v2520
    %v2650 = vunpack.c.l.b16 %v2521
    %v2651 = vunpack.c.l.b16 %v2522
    %v2652 = vunpack.c.l.b16 %v2523
    %v2653 = vunpack.c.l.b16 %v2524
    %v2654 = vunpack.c.l.b16 %v2525
    %v2655 = vunpack.c.l.b16 %v2526
    %v2656 = vunpack.c.l.b16 %v2527
    %v2657 = vpack.c.b16 %v2594, %v2593
    %v2658 = vpack.c.b16 %v2596, %v2595
    %v2659 = vpack.c.b16 %v2598, %v2597
    %v2660 = vpack.c.b16 %v2600, %v2599
    %v2661 = vpack.c.b16 %v2602, %v2601
    %v2662 = vpack.c.b16 %v2604, %v2603
    %v2663 = vpack.c.b16 %v2606, %v2605
    %v2664 = vpack.c.b16 %v2608, %v2607
    %v2665 = vpack.c.b16 %v2610, %v2609
    %v2666 = vpack.c.b16 %v2612, %v2611
    %v2667 = vpack.c.b16 %v2614, %v2613
    %v2668 = vpack.c.b16 %v2616, %v2615
    %v2669 = vpack.c.b16 %v2618, %v2617
    %v2670 = vpack.c.b16 %v2620, %v2619
    %v2671 = vpack.c.b16 %v2622, %v2621
    %v2672 = vpack.c.b16 %v2624, %v2623
    %v2673 = vpack.c.b16 %v2626, %v2625
    %v2674 = vpack.c.b16 %v2628, %v2627
    %v2675 = vpack.c.b16 %v2630, %v2629
    %v2676 = vpack.c.b16 %v2632, %v2631
    %v2677 = vpack.c.b16 %v2634, %v2633
    %v2678 = vpack.c.b16 %v2636, %v2635
    %v2679 = vpack.c.b16 %v2638, %v2637
    %v2680 = vpack.c.b16 %v2640, %v2639
    %v2681 = vpack.c.b16 %v2642, %v2641
    %v2682 = vpack.c.b16 %v2644, %v2643
    %v2683 = vpack.c.b16 %v2646, %v2645
    %v2684 = vpack.c.b16 %v2648, %v2647
    %v2685 = vpack.c.b16 %v2650, %v2649
    %v2686 = vpack.c.b16 %v2652, %v2651
    %v2687 = vpack.c.b16 %v2654, %v2653
    %v2688 = vpack.c.b16 %v2656, %v2655
    %2721 = vmatpush.bf16.msra.mxu0 %v2664
    %2722 = vmatpush.bf16.msra.mxu0 %v2663
    %2723 = vmatpush.bf16.msra.mxu0 %v2662
    %2724 = vmatpush.bf16.msra.mxu0 %v2661
    %2725 = vmatpush.bf16.msra.mxu0 %v2660
    %2726 = vmatpush.bf16.msra.mxu0 %v2659
    %2727 = vmatpush.bf16.msra.mxu0 %v2658
    %2728 = vmatpush.bf16.msra.mxu0 %v2657
    %2729 = vmatmul.bf16.gmra.mxu0 %v2448
    %v2730 = vpop.f32.mrf.mxu0
    %v2731 = vadd.f32 %v2528, %v2730
    %v2732 = vpop.f32.mrf.mxu0
    %v2733 = vadd.f32 %v2528, %v2732
    %2734 = vmatmul.bf16.gmra.mxu0 %v2452
    %v2735 = vpop.f32.mrf.mxu0
    %v2736 = vadd.f32 %v2528, %v2735
    %v2737 = vpop.f32.mrf.mxu0
    %v2738 = vadd.f32 %v2528, %v2737
    %2739 = vmatmul.bf16.gmra.mxu0 %v2456
    %v2740 = vpop.f32.mrf.mxu0
    %v2741 = vadd.f32 %v2528, %v2740
    %v2742 = vpop.f32.mrf.mxu0
    %v2743 = vadd.f32 %v2528, %v2742
    %2744 = vmatmul.bf16.gmra.mxu0 %v2460
    %v2745 = vpop.f32.mrf.mxu0
    %v2746 = vadd.f32 %v2528, %v2745
    %v2747 = vpop.f32.mrf.mxu0
    %v2748 = vadd.f32 %v2528, %v2747
    %2749 = vdwg.mxu0
    %2750 = vmatpush.bf16.msra.mxu0 %v2672
    %2751 = vmatpush.bf16.msra.mxu0 %v2671
    %2752 = vmatpush.bf16.msra.mxu0 %v2670
    %2753 = vmatpush.bf16.msra.mxu0 %v2669
    %2754 = vmatpush.bf16.msra.mxu0 %v2668
    %2755 = vmatpush.bf16.msra.mxu0 %v2667
    %2756 = vmatpush.bf16.msra.mxu0 %v2666
    %2757 = vmatpush.bf16.msra.mxu0 %v2665
    %2758 = vmatmul.bf16.gmra.mxu0 %v2449
    %v2759 = vpop.f32.mrf.mxu0
    %v2760 = vadd.f32 %v2731, %v2759
    %v2761 = vpop.f32.mrf.mxu0
    %v2762 = vadd.f32 %v2733, %v2761
    %2763 = vmatmul.bf16.gmra.mxu0 %v2453
    %v2764 = vpop.f32.mrf.mxu0
    %v2765 = vadd.f32 %v2736, %v2764
    %v2766 = vpop.f32.mrf.mxu0
    %v2767 = vadd.f32 %v2738, %v2766
    %2768 = vmatmul.bf16.gmra.mxu0 %v2457
    %v2769 = vpop.f32.mrf.mxu0
    %v2770 = vadd.f32 %v2741, %v2769
    %v2771 = vpop.f32.mrf.mxu0
    %v2772 = vadd.f32 %v2743, %v2771
    %2773 = vmatmul.bf16.gmra.mxu0 %v2461
    %v2774 = vpop.f32.mrf.mxu0
    %v2775 = vadd.f32 %v2746, %v2774
    %v2776 = vpop.f32.mrf.mxu0
    %v2777 = vadd.f32 %v2748, %v2776
    %2778 = vdwg.mxu0
    %2779 = vmatpush.bf16.msra.mxu0 %v2680
    %2780 = vmatpush.bf16.msra.mxu0 %v2679
    %2781 = vmatpush.bf16.msra.mxu0 %v2678
    %2782 = vmatpush.bf16.msra.mxu0 %v2677
    %2783 = vmatpush.bf16.msra.mxu0 %v2676
    %2784 = vmatpush.bf16.msra.mxu0 %v2675
    %2785 = vmatpush.bf16.msra.mxu0 %v2674
    %2786 = vmatpush.bf16.msra.mxu0 %v2673
    %2787 = vmatmul.bf16.gmra.mxu0 %v2450
    %v2788 = vpop.f32.mrf.mxu0
    %v2789 = vadd.f32 %v2760, %v2788
    %v2790 = vpop.f32.mrf.mxu0
    %v2791 = vadd.f32 %v2762, %v2790
    %2792 = vmatmul.bf16.gmra.mxu0 %v2454
    %v2793 = vpop.f32.mrf.mxu0
    %v2794 = vadd.f32 %v2765, %v2793
    %v2795 = vpop.f32.mrf.mxu0
    %v2796 = vadd.f32 %v2767, %v2795
    %2797 = vmatmul.bf16.gmra.mxu0 %v2458
    %v2798 = vpop.f32.mrf.mxu0
    %v2799 = vadd.f32 %v2770, %v2798
    %v2800 = vpop.f32.mrf.mxu0
    %v2801 = vadd.f32 %v2772, %v2800
    %2802 = vmatmul.bf16.gmra.mxu0 %v2462
    %v2803 = vpop.f32.mrf.mxu0
    %v2804 = vadd.f32 %v2775, %v2803
    %v2805 = vpop.f32.mrf.mxu0
    %v2806 = vadd.f32 %v2777, %v2805
    %2807 = vdwg.mxu0
    %2808 = vmatpush.bf16.msra.mxu0 %v2688
    %2809 = vmatpush.bf16.msra.mxu0 %v2687
    %2810 = vmatpush.bf16.msra.mxu0 %v2686
    %2811 = vmatpush.bf16.msra.mxu0 %v2685
    %2812 = vmatpush.bf16.msra.mxu0 %v2684
    %2813 = vmatpush.bf16.msra.mxu0 %v2683
    %2814 = vmatpush.bf16.msra.mxu0 %v2682
    %2815 = vmatpush.bf16.msra.mxu0 %v2681
    %2816 = vmatmul.bf16.gmra.mxu0 %v2451
    %v2817 = vpop.f32.mrf.mxu0
    %v2818 = vadd.f32 %v2789, %v2817
    %v2819 = vpop.f32.mrf.mxu0
    %v2820 = vadd.f32 %v2791, %v2819
    %2821 = vmatmul.bf16.gmra.mxu0 %v2455
    %v2822 = vpop.f32.mrf.mxu0
    %v2823 = vadd.f32 %v2794, %v2822
    %v2824 = vpop.f32.mrf.mxu0
    %v2825 = vadd.f32 %v2796, %v2824
    %2826 = vmatmul.bf16.gmra.mxu0 %v2459
    %v2827 = vpop.f32.mrf.mxu0
    %v2828 = vadd.f32 %v2799, %v2827
    %v2829 = vpop.f32.mrf.mxu0
    %v2830 = vadd.f32 %v2801, %v2829
    %2831 = vmatmul.bf16.gmra.mxu0 %v2463
    %v2832 = vpop.f32.mrf.mxu0
    %v2833 = vadd.f32 %v2804, %v2832
    %v2834 = vpop.f32.mrf.mxu0
    %v2835 = vadd.f32 %v2806, %v2834
    %2836 = vdwg.mxu0
    %v2837 = vadd.f32 %v1113, %v2818
    %v2838 = vadd.f32 %v1114, %v2820
    %v2839 = vadd.f32 %v1115, %v2823
    %v2840 = vadd.f32 %v1116, %v2825
    %v2841 = vadd.f32 %v1117, %v2828
    %v2842 = vadd.f32 %v1118, %v2830
    %v2843 = vadd.f32 %v1119, %v2833
    %v2844 = vadd.f32 %v1120, %v2835
    %2845 = vst [vmem:[#allocation13] sm:$0xff] %v2837
    %2846 = vst [vmem:[#allocation13 + $0x8] sm:$0xff] %v2838
    %2847 = vst [vmem:[#allocation13 + $0x10] sm:$0xff] %v2839
    %2848 = vst [vmem:[#allocation13 + $0x18] sm:$0xff] %v2840
    %2849 = vst [vmem:[#allocation13 + $0x20] sm:$0xff] %v2841
    %2850 = vst [vmem:[#allocation13 + $0x28] sm:$0xff] %v2842
    %2851 = vst [vmem:[#allocation13 + $0x30] sm:$0xff] %v2843
    %2852 = vst [vmem:[#allocation13 + $0x38] sm:$0xff] %v2844
    // Predicated region
    $region54: #{tpu_custom_call.1} parent=1 // pred_check
      _
    $region55: #{tpu_custom_call.1} parent=1 // pred_check_branch
      %2854 = sbr.rel (0) target = $region57
    $region56: #{tpu_custom_call.1} parent=1 // pred_region
      %2856 = vsyncadd [#allocation4], 0
      %s2857 = sshll.u32 [#allocation13], 4
      %s2858 = int_to_ptr.vmem [resolvable:$true] %s2857
      %s2859 = sshll.u32 %s7, 4
      %s2860 = int_to_ptr.hbm [resolvable:$true] %s2859
      %2865 = dma.vmem_to_hbm [thread:$0]  %s2858, 1024, %s2860, [#allocation4], 128, 128, 8
    $region57: #{tpu_custom_call.1} parent=1 // pred_fallthru
      _
    // Predicated region
    $region58: #{tpu_custom_call.1} parent=1 // pred_check
      _
    $region59: #{tpu_custom_call.1} parent=1 // pred_check_branch
      %2867 = sbr.rel (0) target = $region61
    $region60: #{tpu_custom_call.1} parent=1 // pred_region
      %2869 = dma.done [#allocation4], 1024
    $region61: #{tpu_custom_call.1} parent=1 // pred_fallthru
      _
    %2870 = vsyncpa [#allocation3], 1
    %2871 = vsyncpa [#allocation6], 1
    %2872 = vsyncpa [#allocation9], 1
    %2873 = vsyncpa [#allocation12], 1
    %2874 = vsyncpa [#allocation4], 1

</llo_original>
